<compile_context>
chip_gen: v7x
topology: tpu7x:2x2x1
jax: 0.10.0
libtpu: 0.0.40
codegen_flags: <defaults>
</compile_context>

<pallas_src>
import functools

import jax
import jax.numpy as jnp
import numpy as np
from jax import lax
from jax.experimental import pallas as pl
from jax.experimental.pallas import tpu as pltpu

_TB_MAX = 2048  # max batch-tile rows; multiple of 128 (lane width on all TPU gens)


def _round_up(x, m):
    return (x + m - 1) // m * m


def _actor_mlp_kernel(n_layers, out_dim, x_ref, *refs):
    """Fused MLP on one batch tile.

    x_ref : (tb, in_dim)      batch-major input block
    params: W_i (out_i, in_i) PyTorch layout, fully resident in VMEM
            b_i (out_i, 1)    column bias, broadcast over the lane (batch) axis
            (last-layer W/b zero-padded to out_pad = round_up(out_dim, 8) rows)
    out   : (tb, out_dim)     batch-major output block
    """
    out_ref = refs[-1]
    prefs = refs[:-1]
    hp = lax.Precision.HIGHEST

    x = x_ref[...]  # (tb, in_dim), f32

    # Layer 0: fold the batch->feature transpose into a transposed-RHS matmul:
    #   h[o, b] = sum_k W0[o, k] * x[b, k]   ->  (out_0, tb) feature-major
    w0 = prefs[0][...]
    b0 = prefs[1][...]
    h = lax.dot_general(w0, x, (((1,), (1,)), ((), ())),
                        preferred_element_type=jnp.float32, precision=hp) + b0

    # Remaining layers stay feature-major: ReLU (previous layer) then W @ h + b.
    for i in range(1, n_layers):
        h = jnp.maximum(h, 0.0)  # ReLU on hidden layers (VPU, f32)
        w = prefs[2 * i][...]
        b = prefs[2 * i + 1][...]
        h = jnp.dot(w, h, preferred_element_type=jnp.float32, precision=hp) + b

    # Output layer: lane-dense tanh on (out_pad, tb) (EUP), then a tile-aligned
    # transpose (out_pad % 8 == 0, tb % 128 == 0) to batch-major; drop pad rows.
    t = jnp.tanh(h).T                         # (tb, out_pad)
    out_ref[...] = t[:, :out_dim].astype(out_ref.dtype)


def init_actor_params(key, input_dim, output_dim, hidden_layer_dims):
    """Deterministic init mirroring the PyTorch module.

    The module uses _l = 1/sqrt(weight.size()[0]) = 1/sqrt(out_features) and
    uniform_(-_l, _l) for both weight and bias. Weights are kept in PyTorch
    (out_features, in_features) layout; biases are 1-D (out_features,).
    """
    dims = [input_dim] + list(hidden_layer_dims) + [output_dim]
    params = []
    for i in range(len(dims) - 1):
        fan_in, fan_out = dims[i], dims[i + 1]
        lim = 1.0 / np.sqrt(fan_out)  # matches layer.weight.size()[0] == out_features
        key, kw, kb = jax.random.split(key, 3)
        w = jax.random.uniform(kw, (fan_out, fan_in), jnp.float32, -lim, lim)
        b = jax.random.uniform(kb, (fan_out,), jnp.float32, -lim, lim)
        params.append((w, b))
    return params


@jax.jit
def actor_forward(states, *flat_params):
    """states: (batch, input_dim) f32. flat_params: W0, b0, W1, b1, ...
    with W_i in PyTorch (out_features, in_features) layout, b_i 1-D."""
    n_layers = len(flat_params) // 2
    batch, in_dim = states.shape
    out_dim = flat_params[-2].shape[0]
    out_pad = _round_up(out_dim, 8)

    # Kernel-ready params: biases as (out, 1) columns (lane broadcast); the last
    # layer is zero-padded to out_pad rows so the in-kernel transpose is aligned.
    kparams = []
    for i in range(n_layers):
        w = flat_params[2 * i]
        b = flat_params[2 * i + 1].reshape(-1, 1)
        if i == n_layers - 1 and out_pad != out_dim:
            w = jnp.pad(w, ((0, out_pad - out_dim), (0, 0)))
            b = jnp.pad(b, ((0, out_pad - out_dim), (0, 0)))
        kparams += [w, b]

    # Batch tile: 128-aligned, capped at _TB_MAX. When the batch spans more than
    # one 128-row tile, keep the grid length >= 2 so both v7x TensorCores get
    # work under dimension_semantics=("parallel",). No explicit batch padding:
    # the partial tail block is clamped by the Pallas pipeline.
    b128 = _round_up(batch, 128)
    tb = 128 if b128 <= 128 else min(_TB_MAX, _round_up(pl.cdiv(b128, 2), 128))
    grid = (pl.cdiv(batch, tb),)

    kernel = functools.partial(_actor_mlp_kernel, n_layers, out_dim)

    in_specs = [pl.BlockSpec((tb, in_dim), lambda i: (i, 0))]
    for p in kparams:
        # Whole (tiny) parameter arrays resident in VMEM, same block every step.
        in_specs.append(pl.BlockSpec(p.shape, lambda i: (0, 0)))
    out_specs = pl.BlockSpec((tb, out_dim), lambda i: (i, 0))

    # Advisory cost estimate so XLA schedules this custom call sensibly inside a
    # larger TD3 training step.
    layer_out = [flat_params[2 * k].shape[0] for k in range(n_layers)]
    dims = [in_dim] + layer_out
    flops = 2 * batch * sum(dims[k] * dims[k + 1] for k in range(n_layers))
    param_elems = sum(int(np.prod(p.shape)) for p in flat_params)
    cost = pl.CostEstimate(
        flops=flops,
        transcendentals=batch * out_dim,
        bytes_accessed=4 * (batch * (in_dim + out_dim) + param_elems),
    )

    return pl.pallas_call(
        kernel,
        out_shape=jax.ShapeDtypeStruct((batch, out_dim), jnp.float32),
        grid=grid,
        in_specs=in_specs,
        out_specs=out_specs,
        compiler_params=pltpu.CompilerParams(
            dimension_semantics=("parallel",),     # megacore sharding on v7x
            vmem_limit_bytes=32 * 1024 * 1024,     # live set <= ~8 MiB at tb=2048
        ),
        cost_estimate=cost,
    )(states, *kparams)


def actor_forward_ref(states, params):
    """Pure-JAX reference (batch-major, PyTorch layout) for correctness checking."""
    h = states
    for i, (w, b) in enumerate(params):
        h = h @ w.T + b
        h = jnp.maximum(h, 0.0) if i < len(params) - 1 else jnp.tanh(h)
    return h


if __name__ == "__main__":
    key = jax.random.PRNGKey(0)

    # Config consistent with the module: input_shape=(16,), output_shape=(4,),
    # hidden_layer_dims=[32, 32].
    input_dim, output_dim = 16, 4
    hidden_layer_dims = [32, 32]

    key, k_states, k_params = jax.random.split(key, 3)
    params = init_actor_params(k_params, input_dim, output_dim, hidden_layer_dims)
    flat_params = [p for wb in params for p in wb]

    # Small demo batch (single 128-row tile, partial block handled by clamping).
    batch = 8
    states = jax.random.normal(k_states, (batch, input_dim), jnp.float32)
    out = jax.block_until_ready(actor_forward(states, *flat_params))
    ref = actor_forward_ref(states, params)
    np.testing.assert_allclose(np.asarray(out), np.asarray(ref), rtol=1e-5, atol=1e-5)
    assert out.shape == (batch, output_dim)

    # Non-tile-multiple batch: exercises the multi-step "parallel" grid and the
    # clamped partial tail block (no explicit padding anywhere).
    key, k_big = jax.random.split(key)
    big_batch = 600
    states_big = jax.random.normal(k_big, (big_batch, input_dim), jnp.float32)
    out_big = jax.block_until_ready(actor_forward(states_big, *flat_params))
    ref_big = actor_forward_ref(states_big, params)
    np.testing.assert_allclose(np.asarray(out_big), np.asarray(ref_big), rtol=1e-5, atol=1e-5)
    assert out_big.shape == (big_batch, output_dim)

    print("KERNEL_OK")
</pallas_src>

<mosaic_0001>
module attributes {stable_mosaic.version = 11 : i64} {
  func.func @_actor_mlp_kernel(%arg0: i32, %arg1: memref<128x16xf32, #tpu.memory_space<vmem>>, %arg2: memref<32x16xf32, #tpu.memory_space<vmem>>, %arg3: memref<32x1xf32, #tpu.memory_space<vmem>>, %arg4: memref<32x32xf32, #tpu.memory_space<vmem>>, %arg5: memref<32x1xf32, #tpu.memory_space<vmem>>, %arg6: memref<8x32xf32, #tpu.memory_space<vmem>>, %arg7: memref<8x1xf32, #tpu.memory_space<vmem>>, %arg8: memref<128x4xf32, #tpu.memory_space<vmem>>) attributes {dimension_semantics = [#tpu.dimension_semantics<parallel>], iteration_bounds = array<i64: 1>, scalar_prefetch = 0 : i64, scratch_operands = 0 : i64, tpu.core_type = #tpu.core_type<tc>, window_params = [{transform_indices = @transform_0, window_bounds = array<i64: 128, 16>}, {pipeline_mode = #tpu.pipeline_mode<synchronous>, transform_indices = @transform_1, window_bounds = array<i64: 32, 16>}, {pipeline_mode = #tpu.pipeline_mode<synchronous>, transform_indices = @transform_2, window_bounds = array<i64: 32, 1>}, {pipeline_mode = #tpu.pipeline_mode<synchronous>, transform_indices = @transform_3, window_bounds = array<i64: 32, 32>}, {pipeline_mode = #tpu.pipeline_mode<synchronous>, transform_indices = @transform_4, window_bounds = array<i64: 32, 1>}, {pipeline_mode = #tpu.pipeline_mode<synchronous>, transform_indices = @transform_5, window_bounds = array<i64: 8, 32>}, {pipeline_mode = #tpu.pipeline_mode<synchronous>, transform_indices = @transform_6, window_bounds = array<i64: 8, 1>}, {transform_indices = @transform_7, window_bounds = array<i64: 128, 4>}]} {
    %c0 = arith.constant 0 : index
    %c0_0 = arith.constant 0 : index
    %0 = vector.load %arg1[%c0, %c0_0] : memref<128x16xf32, #tpu.memory_space<vmem>>, vector<128x16xf32>
    %c0_1 = arith.constant 0 : index
    %c0_2 = arith.constant 0 : index
    %1 = vector.load %arg2[%c0_1, %c0_2] : memref<32x16xf32, #tpu.memory_space<vmem>>, vector<32x16xf32>
    %c0_3 = arith.constant 0 : index
    %c0_4 = arith.constant 0 : index
    %2 = vector.load %arg3[%c0_3, %c0_4] : memref<32x1xf32, #tpu.memory_space<vmem>>, vector<32x1xf32>
    %cst = arith.constant dense<0.000000e+00> : vector<32x128xf32>
    %3 = tpu.matmul %1, %0, %cst {dimension_numbers = #tpu.dot_dimension_numbers<[1], [1], [0], [0], [0, 0, 1, 0], [], []>, precision = #tpu.contract_precision<fp32>} : vector<32x16xf32>, vector<128x16xf32>, vector<32x128xf32> -> vector<32x128xf32>
    %4 = vector.broadcast %2 : vector<32x1xf32> to vector<32x128xf32>
    %5 = arith.addf %3, %4 : vector<32x128xf32>
    %cst_5 = arith.constant 0.000000e+00 : f32
    %6 = vector.broadcast %cst_5 : f32 to vector<32x128xf32>
    %7 = arith.maximumf %5, %6 : vector<32x128xf32>
    %c0_6 = arith.constant 0 : index
    %c0_7 = arith.constant 0 : index
    %8 = vector.load %arg4[%c0_6, %c0_7] : memref<32x32xf32, #tpu.memory_space<vmem>>, vector<32x32xf32>
    %c0_8 = arith.constant 0 : index
    %c0_9 = arith.constant 0 : index
    %9 = vector.load %arg5[%c0_8, %c0_9] : memref<32x1xf32, #tpu.memory_space<vmem>>, vector<32x1xf32>
    %cst_10 = arith.constant dense<0.000000e+00> : vector<32x128xf32>
    %10 = tpu.matmul %8, %7, %cst_10 {dimension_numbers = #tpu.dot_dimension_numbers<[1], [0], [0], [1], [0, 0, 1, 1], [], []>, precision = #tpu.contract_precision<fp32>} : vector<32x32xf32>, vector<32x128xf32>, vector<32x128xf32> -> vector<32x128xf32>
    %11 = vector.broadcast %9 : vector<32x1xf32> to vector<32x128xf32>
    %12 = arith.addf %10, %11 : vector<32x128xf32>
    %cst_11 = arith.constant 0.000000e+00 : f32
    %13 = vector.broadcast %cst_11 : f32 to vector<32x128xf32>
    %14 = arith.maximumf %12, %13 : vector<32x128xf32>
    %c0_12 = arith.constant 0 : index
    %c0_13 = arith.constant 0 : index
    %15 = vector.load %arg6[%c0_12, %c0_13] : memref<8x32xf32, #tpu.memory_space<vmem>>, vector<8x32xf32>
    %c0_14 = arith.constant 0 : index
    %c0_15 = arith.constant 0 : index
    %16 = vector.load %arg7[%c0_14, %c0_15] : memref<8x1xf32, #tpu.memory_space<vmem>>, vector<8x1xf32>
    %cst_16 = arith.constant dense<0.000000e+00> : vector<8x128xf32>
    %17 = tpu.matmul %15, %14, %cst_16 {dimension_numbers = #tpu.dot_dimension_numbers<[1], [0], [0], [1], [0, 0, 1, 1], [], []>, precision = #tpu.contract_precision<fp32>} : vector<8x32xf32>, vector<32x128xf32>, vector<8x128xf32> -> vector<8x128xf32>
    %18 = vector.broadcast %16 : vector<8x1xf32> to vector<8x128xf32>
    %19 = arith.addf %17, %18 : vector<8x128xf32>
    %20 = math.tanh %19 : vector<8x128xf32>
    %21 = tpu.transpose %20, [1, 0] : vector<8x128xf32> -> vector<128x8xf32>
    %22 = vector.extract_strided_slice %21 {offsets = [0, 0], sizes = [128, 4], strides = [1, 1]} : vector<128x8xf32> to vector<128x4xf32>
    %c0_17 = arith.constant 0 : index
    %c0_18 = arith.constant 0 : index
    %23 = vector.load %arg8[%c0_17, %c0_18] : memref<128x4xf32, #tpu.memory_space<vmem>>, vector<128x4xf32>
    tpu.vector_store %arg8[%c0_17, %c0_18], %22 {strides = array<i32>} : memref<128x4xf32, #tpu.memory_space<vmem>>, vector<128x4xf32>,
    return
  }
  func.func @transform_0(%arg0: i32) -> (i32, i32) {
    %c0_i32 = arith.constant 0 : i32
    %c0_i32_0 = arith.constant 0 : i32
    return %arg0, %c0_i32 : i32, i32
  }
  func.func @transform_1(%arg0: i32) -> (i32, i32) {
    %c0_i32 = arith.constant 0 : i32
    %c0_i32_0 = arith.constant 0 : i32
    %c0_i32_1 = arith.constant 0 : i32
    return %c0_i32, %c0_i32_0 : i32, i32
  }
  func.func @transform_2(%arg0: i32) -> (i32, i32) {
    %c0_i32 = arith.constant 0 : i32
    %c0_i32_0 = arith.constant 0 : i32
    %c0_i32_1 = arith.constant 0 : i32
    return %c0_i32, %c0_i32_0 : i32, i32
  }
  func.func @transform_3(%arg0: i32) -> (i32, i32) {
    %c0_i32 = arith.constant 0 : i32
    %c0_i32_0 = arith.constant 0 : i32
    %c0_i32_1 = arith.constant 0 : i32
    return %c0_i32, %c0_i32_0 : i32, i32
  }
  func.func @transform_4(%arg0: i32) -> (i32, i32) {
    %c0_i32 = arith.constant 0 : i32
    %c0_i32_0 = arith.constant 0 : i32
    %c0_i32_1 = arith.constant 0 : i32
    return %c0_i32, %c0_i32_0 : i32, i32
  }
  func.func @transform_5(%arg0: i32) -> (i32, i32) {
    %c0_i32 = arith.constant 0 : i32
    %c0_i32_0 = arith.constant 0 : i32
    %c0_i32_1 = arith.constant 0 : i32
    return %c0_i32, %c0_i32_0 : i32, i32
  }
  func.func @transform_6(%arg0: i32) -> (i32, i32) {
    %c0_i32 = arith.constant 0 : i32
    %c0_i32_0 = arith.constant 0 : i32
    %c0_i32_1 = arith.constant 0 : i32
    return %c0_i32, %c0_i32_0 : i32, i32
  }
  func.func @transform_7(%arg0: i32) -> (i32, i32) {
    %c0_i32 = arith.constant 0 : i32
    %c0_i32_0 = arith.constant 0 : i32
    return %arg0, %c0_i32 : i32, i32
  }
}

</mosaic_0001>

<llo_original>
// kernel: actor_forward.1
$region0: #{actor_forward.1}
  #allocation0 [shape = 'u32[]', space=smem, size = 0x4, offset = 0x4, fixed_abs, tag = 'smem constant byte address 0x4 - core index']
  #allocation1 [shape = 'u32[144,128]{1,0:T(1,128)}', space=vmem, size = 0x12000, scoped, tag = 'internal scratch']
  %s0 = inlined_call_operand.vmem [shape: f32[8,16], index: 0, kind: input, shape index: {}]
  %s1 = inlined_call_operand.vmem [shape: f32[32,16], index: 1, kind: input, shape index: {}]
  %s2 = inlined_call_operand.vmem [shape: f32[32,1], index: 2, kind: input, shape index: {}]
  %s3 = inlined_call_operand.vmem [shape: f32[32,32], index: 3, kind: input, shape index: {}]
  %s4 = inlined_call_operand.vmem [shape: f32[32,1], index: 4, kind: input, shape index: {}]
  %s5 = inlined_call_operand.vmem [shape: f32[8,32], index: 5, kind: input, shape index: {}]
  %s6 = inlined_call_operand.vmem [shape: f32[8,1], index: 6, kind: input, shape index: {}]
  %s7 = inlined_call_operand.vmem [shape: f32[8,4], index: 7, kind: output, shape index: {}]
  %s8 = sld [smem:[#allocation0]]
  $region72: #{actor_forward.1} parent=0
    _
  %s10 = ssub.s32 1, %s8
  %s11 = scalar_select 0, %s10, %s8
  $region1: #{actor_forward.1} parent=0
    #allocation2 [shape = 'u8[65536]{0}', space=vmem, size = 0x10000, scoped, tag = 'output window, operand 0, single buffered']
    // Predicated region
    $region2: #{actor_forward.1} parent=1 // pred_check
      _
    $region3: #{actor_forward.1} parent=1 // pred_check_branch
      %13 = sbr.rel (0) target = $region5
    $region4: #{actor_forward.1} parent=1 // pred_region
      _
    $region5: #{actor_forward.1} parent=1 // pred_fallthru
      _
    // Predicated region
    $region6: #{actor_forward.1} parent=1 // pred_check
      _
    $region7: #{actor_forward.1} parent=1 // pred_check_branch
      %15 = sbr.rel (0) target = $region9
    $region8: #{actor_forward.1} parent=1 // pred_region
      _
    $region9: #{actor_forward.1} parent=1 // pred_fallthru
      _
    // Predicated region
    $region10: #{actor_forward.1} parent=1 // pred_check
      _
    $region11: #{actor_forward.1} parent=1 // pred_check_branch
      %17 = sbr.rel (0) target = $region13
    $region12: #{actor_forward.1} parent=1 // pred_region
      _
    $region13: #{actor_forward.1} parent=1 // pred_fallthru
      _
    // Predicated region
    $region14: #{actor_forward.1} parent=1 // pred_check
      _
    $region15: #{actor_forward.1} parent=1 // pred_check_branch
      %19 = sbr.rel (0) target = $region17
    $region16: #{actor_forward.1} parent=1 // pred_region
      _
    $region17: #{actor_forward.1} parent=1 // pred_fallthru
      _
    // Predicated region
    $region18: #{actor_forward.1} parent=1 // pred_check
      _
    $region19: #{actor_forward.1} parent=1 // pred_check_branch
      %21 = sbr.rel (0) target = $region21
    $region20: #{actor_forward.1} parent=1 // pred_region
      _
    $region21: #{actor_forward.1} parent=1 // pred_fallthru
      _
    // Predicated region
    $region22: #{actor_forward.1} parent=1 // pred_check
      _
    $region23: #{actor_forward.1} parent=1 // pred_check_branch
      %23 = sbr.rel (0) target = $region25
    $region24: #{actor_forward.1} parent=1 // pred_region
      _
    $region25: #{actor_forward.1} parent=1 // pred_fallthru
      _
    // Predicated region
    $region26: #{actor_forward.1} parent=1 // pred_check
      _
    $region27: #{actor_forward.1} parent=1 // pred_check_branch
      %25 = sbr.rel (0) target = $region29
    $region28: #{actor_forward.1} parent=1 // pred_region
      _
    $region29: #{actor_forward.1} parent=1 // pred_fallthru
      _
    %v26 = vld [vmem:[%s0] sm:$0xff]
    %v27 = vld [vmem:[%s0 + $0x8] sm:$0xff]
    %v28 = vld [vmem:[%s0 + $0x10] sm:$0xff]
    %v29 = vld [vmem:[%s0 + $0x18] sm:$0xff]
    %v30 = vld [vmem:[%s0 + $0x20] sm:$0xff]
    %v31 = vld [vmem:[%s0 + $0x28] sm:$0xff]
    %v32 = vld [vmem:[%s0 + $0x30] sm:$0xff]
    %v33 = vld [vmem:[%s0 + $0x38] sm:$0xff]
    %v34 = vld [vmem:[%s0 + $0x40] sm:$0xff]
    %v35 = vld [vmem:[%s0 + $0x48] sm:$0xff]
    %v36 = vld [vmem:[%s0 + $0x50] sm:$0xff]
    %v37 = vld [vmem:[%s0 + $0x58] sm:$0xff]
    %v38 = vld [vmem:[%s0 + $0x60] sm:$0xff]
    %v39 = vld [vmem:[%s0 + $0x68] sm:$0xff]
    %v40 = vld [vmem:[%s0 + $0x70] sm:$0xff]
    %v41 = vld [vmem:[%s0 + $0x78] sm:$0xff]
    %v42 = vld [vmem:[%s1] sm:$0xff]
    %v43 = vld [vmem:[%s1 + $0x8] sm:$0xff]
    %v44 = vld [vmem:[%s1 + $0x10] sm:$0xff]
    %v45 = vld [vmem:[%s1 + $0x18] sm:$0xff]
    %v46 = vld [vmem:[%s2] sm:$0xff]
    %v47 = vld [vmem:[%s2 + $0x8] sm:$0xff]
    %v48 = vld [vmem:[%s2 + $0x10] sm:$0xff]
    %v49 = vld [vmem:[%s2 + $0x18] sm:$0xff]
    %51 = vset.pattern.permute.xlu0 0
    %52 = vperm.xlu0 %51, %v46
    %v53 = vpop.permute.xlu0 %52
    %56 = vset.pattern.permute.xlu0 0
    %57 = vperm.xlu0 %56, %v47
    %v58 = vpop.permute.xlu0 %57
    %61 = vset.pattern.permute.xlu0 0
    %62 = vperm.xlu0 %61, %v48
    %v63 = vpop.permute.xlu0 %62
    %66 = vset.pattern.permute.xlu0 0
    %67 = vperm.xlu0 %66, %v49
    %v68 = vpop.permute.xlu0 %67
    %vm70 = vcmask 130048
    %v72 = vsel %vm70, %v42, 0
    %v75 = vsel %vm70, %v43, 0
    %v78 = vsel %vm70, %v44, 0
    %v81 = vsel %vm70, %v45, 0
    %v84 = vsel %vm70, %v26, 0
    %v87 = vsel %vm70, %v27, 0
    %v90 = vsel %vm70, %v28, 0
    %v93 = vsel %vm70, %v29, 0
    %v96 = vsel %vm70, %v30, 0
    %v99 = vsel %vm70, %v31, 0
    %v102 = vsel %vm70, %v32, 0
    %v105 = vsel %vm70, %v33, 0
    %v108 = vsel %vm70, %v34, 0
    %v111 = vsel %vm70, %v35, 0
    %v114 = vsel %vm70, %v36, 0
    %v117 = vsel %vm70, %v37, 0
    %v120 = vsel %vm70, %v38, 0
    %v123 = vsel %vm70, %v39, 0
    %v126 = vsel %vm70, %v40, 0
    %v129 = vsel %vm70, %v41, 0
    %131 = vmatprep.subr.mxu0 0.0
    %v132 = vand.u32 %v84, 4294901760
    %133 = vmatpush1.xpose.msra.mxu0 %v132
    %134 = vmatprep.subr.mxu0 0.0
    %v135 = vand.u32 %v87, 4294901760
    %136 = vmatpush1.xpose.msra.mxu0 %v135
    %137 = vmatprep.subr.mxu0 0.0
    %v138 = vand.u32 %v90, 4294901760
    %139 = vmatpush1.xpose.msra.mxu0 %v138
    %140 = vmatprep.subr.mxu0 0.0
    %v141 = vand.u32 %v93, 4294901760
    %142 = vmatpush1.xpose.msra.mxu0 %v141
    %143 = vmatprep.subr.mxu0 0.0
    %v144 = vand.u32 %v96, 4294901760
    %145 = vmatpush1.xpose.msra.mxu0 %v144
    %146 = vmatprep.subr.mxu0 0.0
    %v147 = vand.u32 %v99, 4294901760
    %148 = vmatpush1.xpose.msra.mxu0 %v147
    %149 = vmatprep.subr.mxu0 0.0
    %v150 = vand.u32 %v102, 4294901760
    %151 = vmatpush1.xpose.msra.mxu0 %v150
    %152 = vmatprep.subr.mxu0 0.0
    %v153 = vand.u32 %v105, 4294901760
    %154 = vmatpush1.xpose.msra.mxu0 %v153
    %155 = vmatprep.subr.mxu0 0.0
    %v156 = vand.u32 %v108, 4294901760
    %157 = vmatpush1.xpose.msra.mxu0 %v156
    %158 = vmatprep.subr.mxu0 0.0
    %v159 = vand.u32 %v111, 4294901760
    %160 = vmatpush1.xpose.msra.mxu0 %v159
    %161 = vmatprep.subr.mxu0 0.0
    %v162 = vand.u32 %v114, 4294901760
    %163 = vmatpush1.xpose.msra.mxu0 %v162
    %164 = vmatprep.subr.mxu0 0.0
    %v165 = vand.u32 %v117, 4294901760
    %166 = vmatpush1.xpose.msra.mxu0 %v165
    %167 = vmatprep.subr.mxu0 0.0
    %v168 = vand.u32 %v120, 4294901760
    %169 = vmatpush1.xpose.msra.mxu0 %v168
    %170 = vmatprep.subr.mxu0 0.0
    %v171 = vand.u32 %v123, 4294901760
    %172 = vmatpush1.xpose.msra.mxu0 %v171
    %173 = vmatprep.subr.mxu0 0.0
    %v174 = vand.u32 %v126, 4294901760
    %175 = vmatpush1.xpose.msra.mxu0 %v174
    %176 = vmatprep.subr.mxu0 0.0
    %v177 = vand.u32 %v129, 4294901760
    %178 = vmatpush1.xpose.msra.mxu0 %v177
    %179 = vmatprep.subr.mxu0 0.0
    %180 = vmatpush1.xpose.msra.mxu0 0.0
    %181 = vmatprep.subr.mxu0 0.0
    %182 = vmatpush1.xpose.msra.mxu0 0.0
    %183 = vmatprep.subr.mxu0 0.0
    %184 = vmatpush1.xpose.msra.mxu0 0.0
    %185 = vmatprep.subr.mxu0 0.0
    %186 = vmatpush1.xpose.msra.mxu0 0.0
    %187 = vmatprep.subr.mxu0 0.0
    %188 = vmatpush1.xpose.msra.mxu0 0.0
    %189 = vmatprep.subr.mxu0 0.0
    %190 = vmatpush1.xpose.msra.mxu0 0.0
    %191 = vmatprep.subr.mxu0 0.0
    %192 = vmatpush1.xpose.msra.mxu0 0.0
    %193 = vmatprep.subr.mxu0 0.0
    %194 = vmatpush1.xpose.msra.mxu0 0.0
    %195 = vmatprep.subr.mxu0 0.0
    %196 = vmatpush1.xpose.msra.mxu0 0.0
    %197 = vmatprep.subr.mxu0 0.0
    %198 = vmatpush1.xpose.msra.mxu0 0.0
    %199 = vmatprep.subr.mxu0 0.0
    %200 = vmatpush1.xpose.msra.mxu0 0.0
    %201 = vmatprep.subr.mxu0 0.0
    %202 = vmatpush1.xpose.msra.mxu0 0.0
    %203 = vmatprep.subr.mxu0 0.0
    %204 = vmatpush1.xpose.msra.mxu0 0.0
    %205 = vmatprep.subr.mxu0 0.0
    %206 = vmatpush1.xpose.msra.mxu0 0.0
    %207 = vmatprep.subr.mxu0 0.0
    %208 = vmatpush1.xpose.msra.mxu0 0.0
    %209 = vmatprep.subr.mxu0 0.0
    %210 = vmatpush1.xpose.msra.mxu0 0.0
    %211 = vmatprep.mubr.f32.mxu0 0.0
    %v212 = vand.u32 %v72, 4294901760
    %v213 = vsub.f32 %v72, %v212
    %v214 = vand.u32 %v213, 4294901760
    %v215 = vsub.f32 %v213, %v214
    %v216 = vand.u32 %v215, 4294901760
    %217 = vmatmul.mubr.f32.gmra.mrb[0].mxu0 %v216
    %v218 = vpop.f32.mrb[0].mxu0
    %v219 = vadd.f32 %v53, %v218
    %v220 = vpop.f32.mrb[0].mxu0
    %221 = vmatprep.mubr.f32.mxu0 0.0
    %v222 = vand.u32 %v75, 4294901760
    %v223 = vsub.f32 %v75, %v222
    %v224 = vand.u32 %v223, 4294901760
    %v225 = vsub.f32 %v223, %v224
    %v226 = vand.u32 %v225, 4294901760
    %227 = vmatmul.mubr.f32.gmra.mrb[0].mxu0 %v226
    %v228 = vpop.f32.mrb[0].mxu0
    %v229 = vadd.f32 %v58, %v228
    %v230 = vpop.f32.mrb[0].mxu0
    %231 = vmatprep.mubr.f32.mxu0 0.0
    %v232 = vand.u32 %v78, 4294901760
    %v233 = vsub.f32 %v78, %v232
    %v234 = vand.u32 %v233, 4294901760
    %v235 = vsub.f32 %v233, %v234
    %v236 = vand.u32 %v235, 4294901760
    %237 = vmatmul.mubr.f32.gmra.mrb[0].mxu0 %v236
    %v238 = vpop.f32.mrb[0].mxu0
    %v239 = vadd.f32 %v63, %v238
    %v240 = vpop.f32.mrb[0].mxu0
    %241 = vmatprep.mubr.f32.mxu0 0.0
    %v242 = vand.u32 %v81, 4294901760
    %v243 = vsub.f32 %v81, %v242
    %v244 = vand.u32 %v243, 4294901760
    %v245 = vsub.f32 %v243, %v244
    %v246 = vand.u32 %v245, 4294901760
    %247 = vmatmul.mubr.f32.gmra.mrb[0].mxu0 %v246
    %v248 = vpop.f32.mrb[0].mxu0
    %v249 = vadd.f32 %v68, %v248
    %v250 = vpop.f32.mrb[0].mxu0
    %251 = vdwg.mxu0
    %252 = vmatprep.subr.mxu0 0.0
    %v253 = vand.u32 %v84, 4294901760
    %v254 = vsub.f32 %v84, %v253
    %v255 = vand.u32 %v254, 4294901760
    %v256 = vsub.f32 %v254, %v255
    %v257 = vand.u32 %v256, 4294901760
    %258 = vmatpush1.xpose.msra.mxu0 %v257
    %259 = vmatprep.subr.mxu0 0.0
    %v260 = vand.u32 %v87, 4294901760
    %v261 = vsub.f32 %v87, %v260
    %v262 = vand.u32 %v261, 4294901760
    %v263 = vsub.f32 %v261, %v262
    %v264 = vand.u32 %v263, 4294901760
    %265 = vmatpush1.xpose.msra.mxu0 %v264
    %266 = vmatprep.subr.mxu0 0.0
    %v267 = vand.u32 %v90, 4294901760
    %v268 = vsub.f32 %v90, %v267
    %v269 = vand.u32 %v268, 4294901760
    %v270 = vsub.f32 %v268, %v269
    %v271 = vand.u32 %v270, 4294901760
    %272 = vmatpush1.xpose.msra.mxu0 %v271
    %273 = vmatprep.subr.mxu0 0.0
    %v274 = vand.u32 %v93, 4294901760
    %v275 = vsub.f32 %v93, %v274
    %v276 = vand.u32 %v275, 4294901760
    %v277 = vsub.f32 %v275, %v276
    %v278 = vand.u32 %v277, 4294901760
    %279 = vmatpush1.xpose.msra.mxu0 %v278
    %280 = vmatprep.subr.mxu0 0.0
    %v281 = vand.u32 %v96, 4294901760
    %v282 = vsub.f32 %v96, %v281
    %v283 = vand.u32 %v282, 4294901760
    %v284 = vsub.f32 %v282, %v283
    %v285 = vand.u32 %v284, 4294901760
    %286 = vmatpush1.xpose.msra.mxu0 %v285
    %287 = vmatprep.subr.mxu0 0.0
    %v288 = vand.u32 %v99, 4294901760
    %v289 = vsub.f32 %v99, %v288
    %v290 = vand.u32 %v289, 4294901760
    %v291 = vsub.f32 %v289, %v290
    %v292 = vand.u32 %v291, 4294901760
    %293 = vmatpush1.xpose.msra.mxu0 %v292
    %294 = vmatprep.subr.mxu0 0.0
    %v295 = vand.u32 %v102, 4294901760
    %v296 = vsub.f32 %v102, %v295
    %v297 = vand.u32 %v296, 4294901760
    %v298 = vsub.f32 %v296, %v297
    %v299 = vand.u32 %v298, 4294901760
    %300 = vmatpush1.xpose.msra.mxu0 %v299
    %301 = vmatprep.subr.mxu0 0.0
    %v302 = vand.u32 %v105, 4294901760
    %v303 = vsub.f32 %v105, %v302
    %v304 = vand.u32 %v303, 4294901760
    %v305 = vsub.f32 %v303, %v304
    %v306 = vand.u32 %v305, 4294901760
    %307 = vmatpush1.xpose.msra.mxu0 %v306
    %308 = vmatprep.subr.mxu0 0.0
    %v309 = vand.u32 %v108, 4294901760
    %v310 = vsub.f32 %v108, %v309
    %v311 = vand.u32 %v310, 4294901760
    %v312 = vsub.f32 %v310, %v311
    %v313 = vand.u32 %v312, 4294901760
    %314 = vmatpush1.xpose.msra.mxu0 %v313
    %315 = vmatprep.subr.mxu0 0.0
    %v316 = vand.u32 %v111, 4294901760
    %v317 = vsub.f32 %v111, %v316
    %v318 = vand.u32 %v317, 4294901760
    %v319 = vsub.f32 %v317, %v318
    %v320 = vand.u32 %v319, 4294901760
    %321 = vmatpush1.xpose.msra.mxu0 %v320
    %322 = vmatprep.subr.mxu0 0.0
    %v323 = vand.u32 %v114, 4294901760
    %v324 = vsub.f32 %v114, %v323
    %v325 = vand.u32 %v324, 4294901760
    %v326 = vsub.f32 %v324, %v325
    %v327 = vand.u32 %v326, 4294901760
    %328 = vmatpush1.xpose.msra.mxu0 %v327
    %329 = vmatprep.subr.mxu0 0.0
    %v330 = vand.u32 %v117, 4294901760
    %v331 = vsub.f32 %v117, %v330
    %v332 = vand.u32 %v331, 4294901760
    %v333 = vsub.f32 %v331, %v332
    %v334 = vand.u32 %v333, 4294901760
    %335 = vmatpush1.xpose.msra.mxu0 %v334
    %336 = vmatprep.subr.mxu0 0.0
    %v337 = vand.u32 %v120, 4294901760
    %v338 = vsub.f32 %v120, %v337
    %v339 = vand.u32 %v338, 4294901760
    %v340 = vsub.f32 %v338, %v339
    %v341 = vand.u32 %v340, 4294901760
    %342 = vmatpush1.xpose.msra.mxu0 %v341
    %343 = vmatprep.subr.mxu0 0.0
    %v344 = vand.u32 %v123, 4294901760
    %v345 = vsub.f32 %v123, %v344
    %v346 = vand.u32 %v345, 4294901760
    %v347 = vsub.f32 %v345, %v346
    %v348 = vand.u32 %v347, 4294901760
    %349 = vmatpush1.xpose.msra.mxu0 %v348
    %350 = vmatprep.subr.mxu0 0.0
    %v351 = vand.u32 %v126, 4294901760
    %v352 = vsub.f32 %v126, %v351
    %v353 = vand.u32 %v352, 4294901760
    %v354 = vsub.f32 %v352, %v353
    %v355 = vand.u32 %v354, 4294901760
    %356 = vmatpush1.xpose.msra.mxu0 %v355
    %357 = vmatprep.subr.mxu0 0.0
    %v358 = vand.u32 %v129, 4294901760
    %v359 = vsub.f32 %v129, %v358
    %v360 = vand.u32 %v359, 4294901760
    %v361 = vsub.f32 %v359, %v360
    %v362 = vand.u32 %v361, 4294901760
    %363 = vmatpush1.xpose.msra.mxu0 %v362
    %364 = vmatprep.subr.mxu0 0.0
    %365 = vmatpush1.xpose.msra.mxu0 0.0
    %366 = vmatprep.subr.mxu0 0.0
    %367 = vmatpush1.xpose.msra.mxu0 0.0
    %368 = vmatprep.subr.mxu0 0.0
    %369 = vmatpush1.xpose.msra.mxu0 0.0
    %370 = vmatprep.subr.mxu0 0.0
    %371 = vmatpush1.xpose.msra.mxu0 0.0
    %372 = vmatprep.subr.mxu0 0.0
    %373 = vmatpush1.xpose.msra.mxu0 0.0
    %374 = vmatprep.subr.mxu0 0.0
    %375 = vmatpush1.xpose.msra.mxu0 0.0
    %376 = vmatprep.subr.mxu0 0.0
    %377 = vmatpush1.xpose.msra.mxu0 0.0
    %378 = vmatprep.subr.mxu0 0.0
    %379 = vmatpush1.xpose.msra.mxu0 0.0
    %380 = vmatprep.subr.mxu0 0.0
    %381 = vmatpush1.xpose.msra.mxu0 0.0
    %382 = vmatprep.subr.mxu0 0.0
    %383 = vmatpush1.xpose.msra.mxu0 0.0
    %384 = vmatprep.subr.mxu0 0.0
    %385 = vmatpush1.xpose.msra.mxu0 0.0
    %386 = vmatprep.subr.mxu0 0.0
    %387 = vmatpush1.xpose.msra.mxu0 0.0
    %388 = vmatprep.subr.mxu0 0.0
    %389 = vmatpush1.xpose.msra.mxu0 0.0
    %390 = vmatprep.subr.mxu0 0.0
    %391 = vmatpush1.xpose.msra.mxu0 0.0
    %392 = vmatprep.subr.mxu0 0.0
    %393 = vmatpush1.xpose.msra.mxu0 0.0
    %394 = vmatprep.subr.mxu0 0.0
    %395 = vmatpush1.xpose.msra.mxu0 0.0
    %396 = vmatprep.mubr.f32.mxu0 0.0
    %v397 = vand.u32 %v72, 4294901760
    %398 = vmatmul.mubr.f32.gmra.mrb[0].mxu0 %v397
    %v399 = vpop.f32.mrb[0].mxu0
    %v400 = vadd.f32 %v219, %v399
    %v401 = vpop.f32.mrb[0].mxu0
    %402 = vmatprep.mubr.f32.mxu0 0.0
    %v403 = vand.u32 %v75, 4294901760
    %404 = vmatmul.mubr.f32.gmra.mrb[0].mxu0 %v403
    %v405 = vpop.f32.mrb[0].mxu0
    %v406 = vadd.f32 %v229, %v405
    %v407 = vpop.f32.mrb[0].mxu0
    %408 = vmatprep.mubr.f32.mxu0 0.0
    %v409 = vand.u32 %v78, 4294901760
    %410 = vmatmul.mubr.f32.gmra.mrb[0].mxu0 %v409
    %v411 = vpop.f32.mrb[0].mxu0
    %v412 = vadd.f32 %v239, %v411
    %v413 = vpop.f32.mrb[0].mxu0
    %414 = vmatprep.mubr.f32.mxu0 0.0
    %v415 = vand.u32 %v81, 4294901760
    %416 = vmatmul.mubr.f32.gmra.mrb[0].mxu0 %v415
    %v417 = vpop.f32.mrb[0].mxu0
    %v418 = vadd.f32 %v249, %v417
    %v419 = vpop.f32.mrb[0].mxu0
    %420 = vdwg.mxu0
    %421 = vmatprep.subr.mxu0 0.0
    %v422 = vand.u32 %v84, 4294901760
    %v423 = vsub.f32 %v84, %v422
    %424 = vmatpush1.xpose.msra.mxu0 %v423
    %425 = vmatprep.subr.mxu0 0.0
    %v426 = vand.u32 %v87, 4294901760
    %v427 = vsub.f32 %v87, %v426
    %428 = vmatpush1.xpose.msra.mxu0 %v427
    %429 = vmatprep.subr.mxu0 0.0
    %v430 = vand.u32 %v90, 4294901760
    %v431 = vsub.f32 %v90, %v430
    %432 = vmatpush1.xpose.msra.mxu0 %v431
    %433 = vmatprep.subr.mxu0 0.0
    %v434 = vand.u32 %v93, 4294901760
    %v435 = vsub.f32 %v93, %v434
    %436 = vmatpush1.xpose.msra.mxu0 %v435
    %437 = vmatprep.subr.mxu0 0.0
    %v438 = vand.u32 %v96, 4294901760
    %v439 = vsub.f32 %v96, %v438
    %440 = vmatpush1.xpose.msra.mxu0 %v439
    %441 = vmatprep.subr.mxu0 0.0
    %v442 = vand.u32 %v99, 4294901760
    %v443 = vsub.f32 %v99, %v442
    %444 = vmatpush1.xpose.msra.mxu0 %v443
    %445 = vmatprep.subr.mxu0 0.0
    %v446 = vand.u32 %v102, 4294901760
    %v447 = vsub.f32 %v102, %v446
    %448 = vmatpush1.xpose.msra.mxu0 %v447
    %449 = vmatprep.subr.mxu0 0.0
    %v450 = vand.u32 %v105, 4294901760
    %v451 = vsub.f32 %v105, %v450
    %452 = vmatpush1.xpose.msra.mxu0 %v451
    %453 = vmatprep.subr.mxu0 0.0
    %v454 = vand.u32 %v108, 4294901760
    %v455 = vsub.f32 %v108, %v454
    %456 = vmatpush1.xpose.msra.mxu0 %v455
    %457 = vmatprep.subr.mxu0 0.0
    %v458 = vand.u32 %v111, 4294901760
    %v459 = vsub.f32 %v111, %v458
    %460 = vmatpush1.xpose.msra.mxu0 %v459
    %461 = vmatprep.subr.mxu0 0.0
    %v462 = vand.u32 %v114, 4294901760
    %v463 = vsub.f32 %v114, %v462
    %464 = vmatpush1.xpose.msra.mxu0 %v463
    %465 = vmatprep.subr.mxu0 0.0
    %v466 = vand.u32 %v117, 4294901760
    %v467 = vsub.f32 %v117, %v466
    %468 = vmatpush1.xpose.msra.mxu0 %v467
    %469 = vmatprep.subr.mxu0 0.0
    %v470 = vand.u32 %v120, 4294901760
    %v471 = vsub.f32 %v120, %v470
    %472 = vmatpush1.xpose.msra.mxu0 %v471
    %473 = vmatprep.subr.mxu0 0.0
    %v474 = vand.u32 %v123, 4294901760
    %v475 = vsub.f32 %v123, %v474
    %476 = vmatpush1.xpose.msra.mxu0 %v475
    %477 = vmatprep.subr.mxu0 0.0
    %v478 = vand.u32 %v126, 4294901760
    %v479 = vsub.f32 %v126, %v478
    %480 = vmatpush1.xpose.msra.mxu0 %v479
    %481 = vmatprep.subr.mxu0 0.0
    %v482 = vand.u32 %v129, 4294901760
    %v483 = vsub.f32 %v129, %v482
    %484 = vmatpush1.xpose.msra.mxu0 %v483
    %485 = vmatprep.subr.mxu0 0.0
    %486 = vmatpush1.xpose.msra.mxu0 0.0
    %487 = vmatprep.subr.mxu0 0.0
    %488 = vmatpush1.xpose.msra.mxu0 0.0
    %489 = vmatprep.subr.mxu0 0.0
    %490 = vmatpush1.xpose.msra.mxu0 0.0
    %491 = vmatprep.subr.mxu0 0.0
    %492 = vmatpush1.xpose.msra.mxu0 0.0
    %493 = vmatprep.subr.mxu0 0.0
    %494 = vmatpush1.xpose.msra.mxu0 0.0
    %495 = vmatprep.subr.mxu0 0.0
    %496 = vmatpush1.xpose.msra.mxu0 0.0
    %497 = vmatprep.subr.mxu0 0.0
    %498 = vmatpush1.xpose.msra.mxu0 0.0
    %499 = vmatprep.subr.mxu0 0.0
    %500 = vmatpush1.xpose.msra.mxu0 0.0
    %501 = vmatprep.subr.mxu0 0.0
    %502 = vmatpush1.xpose.msra.mxu0 0.0
    %503 = vmatprep.subr.mxu0 0.0
    %504 = vmatpush1.xpose.msra.mxu0 0.0
    %505 = vmatprep.subr.mxu0 0.0
    %506 = vmatpush1.xpose.msra.mxu0 0.0
    %507 = vmatprep.subr.mxu0 0.0
    %508 = vmatpush1.xpose.msra.mxu0 0.0
    %509 = vmatprep.subr.mxu0 0.0
    %510 = vmatpush1.xpose.msra.mxu0 0.0
    %511 = vmatprep.subr.mxu0 0.0
    %512 = vmatpush1.xpose.msra.mxu0 0.0
    %513 = vmatprep.subr.mxu0 0.0
    %514 = vmatpush1.xpose.msra.mxu0 0.0
    %515 = vmatprep.subr.mxu0 0.0
    %516 = vmatpush1.xpose.msra.mxu0 0.0
    %517 = vmatprep.mubr.f32.mxu0 0.0
    %v518 = vand.u32 %v72, 4294901760
    %v519 = vsub.f32 %v72, %v518
    %520 = vmatmul.mubr.f32.gmra.mrb[0].mxu0 %v519
    %v521 = vpop.f32.mrb[0].mxu0
    %v522 = vadd.f32 %v400, %v521
    %v523 = vpop.f32.mrb[0].mxu0
    %524 = vmatprep.mubr.f32.mxu0 0.0
    %v525 = vand.u32 %v75, 4294901760
    %v526 = vsub.f32 %v75, %v525
    %527 = vmatmul.mubr.f32.gmra.mrb[0].mxu0 %v526
    %v528 = vpop.f32.mrb[0].mxu0
    %v529 = vadd.f32 %v406, %v528
    %v530 = vpop.f32.mrb[0].mxu0
    %531 = vmatprep.mubr.f32.mxu0 0.0
    %v532 = vand.u32 %v78, 4294901760
    %v533 = vsub.f32 %v78, %v532
    %534 = vmatmul.mubr.f32.gmra.mrb[0].mxu0 %v533
    %v535 = vpop.f32.mrb[0].mxu0
    %v536 = vadd.f32 %v412, %v535
    %v537 = vpop.f32.mrb[0].mxu0
    %538 = vmatprep.mubr.f32.mxu0 0.0
    %v539 = vand.u32 %v81, 4294901760
    %v540 = vsub.f32 %v81, %v539
    %541 = vmatmul.mubr.f32.gmra.mrb[0].mxu0 %v540
    %v542 = vpop.f32.mrb[0].mxu0
    %v543 = vadd.f32 %v418, %v542
    %v544 = vpop.f32.mrb[0].mxu0
    %545 = vdwg.mxu0
    %546 = vmatprep.subr.mxu0 0.0
    %v547 = vand.u32 %v84, 4294901760
    %548 = vmatpush1.xpose.msra.mxu0 %v547
    %549 = vmatprep.subr.mxu0 0.0
    %v550 = vand.u32 %v87, 4294901760
    %551 = vmatpush1.xpose.msra.mxu0 %v550
    %552 = vmatprep.subr.mxu0 0.0
    %v553 = vand.u32 %v90, 4294901760
    %554 = vmatpush1.xpose.msra.mxu0 %v553
    %555 = vmatprep.subr.mxu0 0.0
    %v556 = vand.u32 %v93, 4294901760
    %557 = vmatpush1.xpose.msra.mxu0 %v556
    %558 = vmatprep.subr.mxu0 0.0
    %v559 = vand.u32 %v96, 4294901760
    %560 = vmatpush1.xpose.msra.mxu0 %v559
    %561 = vmatprep.subr.mxu0 0.0
    %v562 = vand.u32 %v99, 4294901760
    %563 = vmatpush1.xpose.msra.mxu0 %v562
    %564 = vmatprep.subr.mxu0 0.0
    %v565 = vand.u32 %v102, 4294901760
    %566 = vmatpush1.xpose.msra.mxu0 %v565
    %567 = vmatprep.subr.mxu0 0.0
    %v568 = vand.u32 %v105, 4294901760
    %569 = vmatpush1.xpose.msra.mxu0 %v568
    %570 = vmatprep.subr.mxu0 0.0
    %v571 = vand.u32 %v108, 4294901760
    %572 = vmatpush1.xpose.msra.mxu0 %v571
    %573 = vmatprep.subr.mxu0 0.0
    %v574 = vand.u32 %v111, 4294901760
    %575 = vmatpush1.xpose.msra.mxu0 %v574
    %576 = vmatprep.subr.mxu0 0.0
    %v577 = vand.u32 %v114, 4294901760
    %578 = vmatpush1.xpose.msra.mxu0 %v577
    %579 = vmatprep.subr.mxu0 0.0
    %v580 = vand.u32 %v117, 4294901760
    %581 = vmatpush1.xpose.msra.mxu0 %v580
    %582 = vmatprep.subr.mxu0 0.0
    %v583 = vand.u32 %v120, 4294901760
    %584 = vmatpush1.xpose.msra.mxu0 %v583
    %585 = vmatprep.subr.mxu0 0.0
    %v586 = vand.u32 %v123, 4294901760
    %587 = vmatpush1.xpose.msra.mxu0 %v586
    %588 = vmatprep.subr.mxu0 0.0
    %v589 = vand.u32 %v126, 4294901760
    %590 = vmatpush1.xpose.msra.mxu0 %v589
    %591 = vmatprep.subr.mxu0 0.0
    %v592 = vand.u32 %v129, 4294901760
    %593 = vmatpush1.xpose.msra.mxu0 %v592
    %594 = vmatprep.subr.mxu0 0.0
    %595 = vmatpush1.xpose.msra.mxu0 0.0
    %596 = vmatprep.subr.mxu0 0.0
    %597 = vmatpush1.xpose.msra.mxu0 0.0
    %598 = vmatprep.subr.mxu0 0.0
    %599 = vmatpush1.xpose.msra.mxu0 0.0
    %600 = vmatprep.subr.mxu0 0.0
    %601 = vmatpush1.xpose.msra.mxu0 0.0
    %602 = vmatprep.subr.mxu0 0.0
    %603 = vmatpush1.xpose.msra.mxu0 0.0
    %604 = vmatprep.subr.mxu0 0.0
    %605 = vmatpush1.xpose.msra.mxu0 0.0
    %606 = vmatprep.subr.mxu0 0.0
    %607 = vmatpush1.xpose.msra.mxu0 0.0
    %608 = vmatprep.subr.mxu0 0.0
    %609 = vmatpush1.xpose.msra.mxu0 0.0
    %610 = vmatprep.subr.mxu0 0.0
    %611 = vmatpush1.xpose.msra.mxu0 0.0
    %612 = vmatprep.subr.mxu0 0.0
    %613 = vmatpush1.xpose.msra.mxu0 0.0
    %614 = vmatprep.subr.mxu0 0.0
    %615 = vmatpush1.xpose.msra.mxu0 0.0
    %616 = vmatprep.subr.mxu0 0.0
    %617 = vmatpush1.xpose.msra.mxu0 0.0
    %618 = vmatprep.subr.mxu0 0.0
    %619 = vmatpush1.xpose.msra.mxu0 0.0
    %620 = vmatprep.subr.mxu0 0.0
    %621 = vmatpush1.xpose.msra.mxu0 0.0
    %622 = vmatprep.subr.mxu0 0.0
    %623 = vmatpush1.xpose.msra.mxu0 0.0
    %624 = vmatprep.subr.mxu0 0.0
    %625 = vmatpush1.xpose.msra.mxu0 0.0
    %626 = vmatprep.mubr.f32.mxu0 0.0
    %v627 = vand.u32 %v72, 4294901760
    %v628 = vsub.f32 %v72, %v627
    %v629 = vand.u32 %v628, 4294901760
    %630 = vmatmul.mubr.f32.gmra.mrb[0].mxu0 %v629
    %v631 = vpop.f32.mrb[0].mxu0
    %v632 = vadd.f32 %v522, %v631
    %v633 = vpop.f32.mrb[0].mxu0
    %634 = vmatprep.mubr.f32.mxu0 0.0
    %v635 = vand.u32 %v75, 4294901760
    %v636 = vsub.f32 %v75, %v635
    %v637 = vand.u32 %v636, 4294901760
    %638 = vmatmul.mubr.f32.gmra.mrb[0].mxu0 %v637
    %v639 = vpop.f32.mrb[0].mxu0
    %v640 = vadd.f32 %v529, %v639
    %v641 = vpop.f32.mrb[0].mxu0
    %642 = vmatprep.mubr.f32.mxu0 0.0
    %v643 = vand.u32 %v78, 4294901760
    %v644 = vsub.f32 %v78, %v643
    %v645 = vand.u32 %v644, 4294901760
    %646 = vmatmul.mubr.f32.gmra.mrb[0].mxu0 %v645
    %v647 = vpop.f32.mrb[0].mxu0
    %v648 = vadd.f32 %v536, %v647
    %v649 = vpop.f32.mrb[0].mxu0
    %650 = vmatprep.mubr.f32.mxu0 0.0
    %v651 = vand.u32 %v81, 4294901760
    %v652 = vsub.f32 %v81, %v651
    %v653 = vand.u32 %v652, 4294901760
    %654 = vmatmul.mubr.f32.gmra.mrb[0].mxu0 %v653
    %v655 = vpop.f32.mrb[0].mxu0
    %v656 = vadd.f32 %v543, %v655
    %v657 = vpop.f32.mrb[0].mxu0
    %658 = vdwg.mxu0
    %659 = vmatprep.subr.mxu0 0.0
    %v660 = vand.u32 %v84, 4294901760
    %v661 = vsub.f32 %v84, %v660
    %v662 = vand.u32 %v661, 4294901760
    %663 = vmatpush1.xpose.msra.mxu0 %v662
    %664 = vmatprep.subr.mxu0 0.0
    %v665 = vand.u32 %v87, 4294901760
    %v666 = vsub.f32 %v87, %v665
    %v667 = vand.u32 %v666, 4294901760
    %668 = vmatpush1.xpose.msra.mxu0 %v667
    %669 = vmatprep.subr.mxu0 0.0
    %v670 = vand.u32 %v90, 4294901760
    %v671 = vsub.f32 %v90, %v670
    %v672 = vand.u32 %v671, 4294901760
    %673 = vmatpush1.xpose.msra.mxu0 %v672
    %674 = vmatprep.subr.mxu0 0.0
    %v675 = vand.u32 %v93, 4294901760
    %v676 = vsub.f32 %v93, %v675
    %v677 = vand.u32 %v676, 4294901760
    %678 = vmatpush1.xpose.msra.mxu0 %v677
    %679 = vmatprep.subr.mxu0 0.0
    %v680 = vand.u32 %v96, 4294901760
    %v681 = vsub.f32 %v96, %v680
    %v682 = vand.u32 %v681, 4294901760
    %683 = vmatpush1.xpose.msra.mxu0 %v682
    %684 = vmatprep.subr.mxu0 0.0
    %v685 = vand.u32 %v99, 4294901760
    %v686 = vsub.f32 %v99, %v685
    %v687 = vand.u32 %v686, 4294901760
    %688 = vmatpush1.xpose.msra.mxu0 %v687
    %689 = vmatprep.subr.mxu0 0.0
    %v690 = vand.u32 %v102, 4294901760
    %v691 = vsub.f32 %v102, %v690
    %v692 = vand.u32 %v691, 4294901760
    %693 = vmatpush1.xpose.msra.mxu0 %v692
    %694 = vmatprep.subr.mxu0 0.0
    %v695 = vand.u32 %v105, 4294901760
    %v696 = vsub.f32 %v105, %v695
    %v697 = vand.u32 %v696, 4294901760
    %698 = vmatpush1.xpose.msra.mxu0 %v697
    %699 = vmatprep.subr.mxu0 0.0
    %v700 = vand.u32 %v108, 4294901760
    %v701 = vsub.f32 %v108, %v700
    %v702 = vand.u32 %v701, 4294901760
    %703 = vmatpush1.xpose.msra.mxu0 %v702
    %704 = vmatprep.subr.mxu0 0.0
    %v705 = vand.u32 %v111, 4294901760
    %v706 = vsub.f32 %v111, %v705
    %v707 = vand.u32 %v706, 4294901760
    %708 = vmatpush1.xpose.msra.mxu0 %v707
    %709 = vmatprep.subr.mxu0 0.0
    %v710 = vand.u32 %v114, 4294901760
    %v711 = vsub.f32 %v114, %v710
    %v712 = vand.u32 %v711, 4294901760
    %713 = vmatpush1.xpose.msra.mxu0 %v712
    %714 = vmatprep.subr.mxu0 0.0
    %v715 = vand.u32 %v117, 4294901760
    %v716 = vsub.f32 %v117, %v715
    %v717 = vand.u32 %v716, 4294901760
    %718 = vmatpush1.xpose.msra.mxu0 %v717
    %719 = vmatprep.subr.mxu0 0.0
    %v720 = vand.u32 %v120, 4294901760
    %v721 = vsub.f32 %v120, %v720
    %v722 = vand.u32 %v721, 4294901760
    %723 = vmatpush1.xpose.msra.mxu0 %v722
    %724 = vmatprep.subr.mxu0 0.0
    %v725 = vand.u32 %v123, 4294901760
    %v726 = vsub.f32 %v123, %v725
    %v727 = vand.u32 %v726, 4294901760
    %728 = vmatpush1.xpose.msra.mxu0 %v727
    %729 = vmatprep.subr.mxu0 0.0
    %v730 = vand.u32 %v126, 4294901760
    %v731 = vsub.f32 %v126, %v730
    %v732 = vand.u32 %v731, 4294901760
    %733 = vmatpush1.xpose.msra.mxu0 %v732
    %734 = vmatprep.subr.mxu0 0.0
    %v735 = vand.u32 %v129, 4294901760
    %v736 = vsub.f32 %v129, %v735
    %v737 = vand.u32 %v736, 4294901760
    %738 = vmatpush1.xpose.msra.mxu0 %v737
    %739 = vmatprep.subr.mxu0 0.0
    %740 = vmatpush1.xpose.msra.mxu0 0.0
    %741 = vmatprep.subr.mxu0 0.0
    %742 = vmatpush1.xpose.msra.mxu0 0.0
    %743 = vmatprep.subr.mxu0 0.0
    %744 = vmatpush1.xpose.msra.mxu0 0.0
    %745 = vmatprep.subr.mxu0 0.0
    %746 = vmatpush1.xpose.msra.mxu0 0.0
    %747 = vmatprep.subr.mxu0 0.0
    %748 = vmatpush1.xpose.msra.mxu0 0.0
    %749 = vmatprep.subr.mxu0 0.0
    %750 = vmatpush1.xpose.msra.mxu0 0.0
    %751 = vmatprep.subr.mxu0 0.0
    %752 = vmatpush1.xpose.msra.mxu0 0.0
    %753 = vmatprep.subr.mxu0 0.0
    %754 = vmatpush1.xpose.msra.mxu0 0.0
    %755 = vmatprep.subr.mxu0 0.0
    %756 = vmatpush1.xpose.msra.mxu0 0.0
    %757 = vmatprep.subr.mxu0 0.0
    %758 = vmatpush1.xpose.msra.mxu0 0.0
    %759 = vmatprep.subr.mxu0 0.0
    %760 = vmatpush1.xpose.msra.mxu0 0.0
    %761 = vmatprep.subr.mxu0 0.0
    %762 = vmatpush1.xpose.msra.mxu0 0.0
    %763 = vmatprep.subr.mxu0 0.0
    %764 = vmatpush1.xpose.msra.mxu0 0.0
    %765 = vmatprep.subr.mxu0 0.0
    %766 = vmatpush1.xpose.msra.mxu0 0.0
    %767 = vmatprep.subr.mxu0 0.0
    %768 = vmatpush1.xpose.msra.mxu0 0.0
    %769 = vmatprep.subr.mxu0 0.0
    %770 = vmatpush1.xpose.msra.mxu0 0.0
    %771 = vmatprep.mubr.f32.mxu0 0.0
    %v772 = vand.u32 %v72, 4294901760
    %773 = vmatmul.mubr.f32.gmra.mrb[0].mxu0 %v772
    %v774 = vpop.f32.mrb[0].mxu0
    %v775 = vadd.f32 %v632, %v774
    %v776 = vpop.f32.mrb[0].mxu0
    %777 = vmatprep.mubr.f32.mxu0 0.0
    %v778 = vand.u32 %v75, 4294901760
    %779 = vmatmul.mubr.f32.gmra.mrb[0].mxu0 %v778
    %v780 = vpop.f32.mrb[0].mxu0
    %v781 = vadd.f32 %v640, %v780
    %v782 = vpop.f32.mrb[0].mxu0
    %783 = vmatprep.mubr.f32.mxu0 0.0
    %v784 = vand.u32 %v78, 4294901760
    %785 = vmatmul.mubr.f32.gmra.mrb[0].mxu0 %v784
    %v786 = vpop.f32.mrb[0].mxu0
    %v787 = vadd.f32 %v648, %v786
    %v788 = vpop.f32.mrb[0].mxu0
    %789 = vmatprep.mubr.f32.mxu0 0.0
    %v790 = vand.u32 %v81, 4294901760
    %791 = vmatmul.mubr.f32.gmra.mrb[0].mxu0 %v790
    %v792 = vpop.f32.mrb[0].mxu0
    %v793 = vadd.f32 %v656, %v792
    %v794 = vpop.f32.mrb[0].mxu0
    %795 = vdwg.mxu0
    %796 = vmatprep.subr.mxu0 0.0
    %v797 = vand.u32 %v84, 4294901760
    %798 = vmatpush1.xpose.msra.mxu0 %v797
    %799 = vmatprep.subr.mxu0 0.0
    %v800 = vand.u32 %v87, 4294901760
    %801 = vmatpush1.xpose.msra.mxu0 %v800
    %802 = vmatprep.subr.mxu0 0.0
    %v803 = vand.u32 %v90, 4294901760
    %804 = vmatpush1.xpose.msra.mxu0 %v803
    %805 = vmatprep.subr.mxu0 0.0
    %v806 = vand.u32 %v93, 4294901760
    %807 = vmatpush1.xpose.msra.mxu0 %v806
    %808 = vmatprep.subr.mxu0 0.0
    %v809 = vand.u32 %v96, 4294901760
    %810 = vmatpush1.xpose.msra.mxu0 %v809
    %811 = vmatprep.subr.mxu0 0.0
    %v812 = vand.u32 %v99, 4294901760
    %813 = vmatpush1.xpose.msra.mxu0 %v812
    %814 = vmatprep.subr.mxu0 0.0
    %v815 = vand.u32 %v102, 4294901760
    %816 = vmatpush1.xpose.msra.mxu0 %v815
    %817 = vmatprep.subr.mxu0 0.0
    %v818 = vand.u32 %v105, 4294901760
    %819 = vmatpush1.xpose.msra.mxu0 %v818
    %820 = vmatprep.subr.mxu0 0.0
    %v821 = vand.u32 %v108, 4294901760
    %822 = vmatpush1.xpose.msra.mxu0 %v821
    %823 = vmatprep.subr.mxu0 0.0
    %v824 = vand.u32 %v111, 4294901760
    %825 = vmatpush1.xpose.msra.mxu0 %v824
    %826 = vmatprep.subr.mxu0 0.0
    %v827 = vand.u32 %v114, 4294901760
    %828 = vmatpush1.xpose.msra.mxu0 %v827
    %829 = vmatprep.subr.mxu0 0.0
    %v830 = vand.u32 %v117, 4294901760
    %831 = vmatpush1.xpose.msra.mxu0 %v830
    %832 = vmatprep.subr.mxu0 0.0
    %v833 = vand.u32 %v120, 4294901760
    %834 = vmatpush1.xpose.msra.mxu0 %v833
    %835 = vmatprep.subr.mxu0 0.0
    %v836 = vand.u32 %v123, 4294901760
    %837 = vmatpush1.xpose.msra.mxu0 %v836
    %838 = vmatprep.subr.mxu0 0.0
    %v839 = vand.u32 %v126, 4294901760
    %840 = vmatpush1.xpose.msra.mxu0 %v839
    %841 = vmatprep.subr.mxu0 0.0
    %v842 = vand.u32 %v129, 4294901760
    %843 = vmatpush1.xpose.msra.mxu0 %v842
    %844 = vmatprep.subr.mxu0 0.0
    %845 = vmatpush1.xpose.msra.mxu0 0.0
    %846 = vmatprep.subr.mxu0 0.0
    %847 = vmatpush1.xpose.msra.mxu0 0.0
    %848 = vmatprep.subr.mxu0 0.0
    %849 = vmatpush1.xpose.msra.mxu0 0.0
    %850 = vmatprep.subr.mxu0 0.0
    %851 = vmatpush1.xpose.msra.mxu0 0.0
    %852 = vmatprep.subr.mxu0 0.0
    %853 = vmatpush1.xpose.msra.mxu0 0.0
    %854 = vmatprep.subr.mxu0 0.0
    %855 = vmatpush1.xpose.msra.mxu0 0.0
    %856 = vmatprep.subr.mxu0 0.0
    %857 = vmatpush1.xpose.msra.mxu0 0.0
    %858 = vmatprep.subr.mxu0 0.0
    %859 = vmatpush1.xpose.msra.mxu0 0.0
    %860 = vmatprep.subr.mxu0 0.0
    %861 = vmatpush1.xpose.msra.mxu0 0.0
    %862 = vmatprep.subr.mxu0 0.0
    %863 = vmatpush1.xpose.msra.mxu0 0.0
    %864 = vmatprep.subr.mxu0 0.0
    %865 = vmatpush1.xpose.msra.mxu0 0.0
    %866 = vmatprep.subr.mxu0 0.0
    %867 = vmatpush1.xpose.msra.mxu0 0.0
    %868 = vmatprep.subr.mxu0 0.0
    %869 = vmatpush1.xpose.msra.mxu0 0.0
    %870 = vmatprep.subr.mxu0 0.0
    %871 = vmatpush1.xpose.msra.mxu0 0.0
    %872 = vmatprep.subr.mxu0 0.0
    %873 = vmatpush1.xpose.msra.mxu0 0.0
    %874 = vmatprep.subr.mxu0 0.0
    %875 = vmatpush1.xpose.msra.mxu0 0.0
    %876 = vmatprep.mubr.f32.mxu0 0.0
    %v877 = vand.u32 %v72, 4294901760
    %878 = vmatmul.mubr.f32.gmra.mrb[0].mxu0 %v877
    %v879 = vpop.f32.mrb[0].mxu0
    %v880 = vadd.f32 %v775, %v879
    %v881 = vpop.f32.mrb[0].mxu0
    %882 = vmatprep.mubr.f32.mxu0 0.0
    %v883 = vand.u32 %v75, 4294901760
    %884 = vmatmul.mubr.f32.gmra.mrb[0].mxu0 %v883
    %v885 = vpop.f32.mrb[0].mxu0
    %v886 = vadd.f32 %v781, %v885
    %v887 = vpop.f32.mrb[0].mxu0
    %888 = vmatprep.mubr.f32.mxu0 0.0
    %v889 = vand.u32 %v78, 4294901760
    %890 = vmatmul.mubr.f32.gmra.mrb[0].mxu0 %v889
    %v891 = vpop.f32.mrb[0].mxu0
    %v892 = vadd.f32 %v787, %v891
    %v893 = vpop.f32.mrb[0].mxu0
    %894 = vmatprep.mubr.f32.mxu0 0.0
    %v895 = vand.u32 %v81, 4294901760
    %896 = vmatmul.mubr.f32.gmra.mrb[0].mxu0 %v895
    %v897 = vpop.f32.mrb[0].mxu0
    %v898 = vadd.f32 %v793, %v897
    %v899 = vpop.f32.mrb[0].mxu0
    %900 = vdwg.mxu0
    %v901 = vmax.f32 %v880, 0.0
    %v902 = vmax.f32 %v886, 0.0
    %v903 = vmax.f32 %v892, 0.0
    %v904 = vmax.f32 %v898, 0.0
    %v905 = vld [vmem:[%s3] sm:$0xff]
    %v906 = vld [vmem:[%s3 + $0x8] sm:$0xff]
    %v907 = vld [vmem:[%s3 + $0x10] sm:$0xff]
    %v908 = vld [vmem:[%s3 + $0x18] sm:$0xff]
    %v909 = vld [vmem:[%s4] sm:$0xff]
    %v910 = vld [vmem:[%s4 + $0x8] sm:$0xff]
    %v911 = vld [vmem:[%s4 + $0x10] sm:$0xff]
    %v912 = vld [vmem:[%s4 + $0x18] sm:$0xff]
    %914 = vset.pattern.permute.xlu0 0
    %915 = vperm.xlu0 %914, %v909
    %v916 = vpop.permute.xlu0 %915
    %919 = vset.pattern.permute.xlu0 0
    %920 = vperm.xlu0 %919, %v910
    %v921 = vpop.permute.xlu0 %920
    %924 = vset.pattern.permute.xlu0 0
    %925 = vperm.xlu0 %924, %v911
    %v926 = vpop.permute.xlu0 %925
    %929 = vset.pattern.permute.xlu0 0
    %930 = vperm.xlu0 %929, %v912
    %v931 = vpop.permute.xlu0 %930
    %vm933 = vcmask 261120
    %v935 = vsel %vm933, %v905, 0
    %v938 = vsel %vm933, %v906, 0
    %v941 = vsel %vm933, %v907, 0
    %v944 = vsel %vm933, %v908, 0
    %946 = vmatprep.subr.mxu0 0.0
    %v947 = vand.u32 %v901, 4294901760
    %948 = vmatpush1.msra.mxu0 %v947
    %949 = vmatprep.subr.mxu0 0.0
    %v950 = vand.u32 %v902, 4294901760
    %951 = vmatpush1.msra.mxu0 %v950
    %952 = vmatprep.subr.mxu0 0.0
    %v953 = vand.u32 %v903, 4294901760
    %954 = vmatpush1.msra.mxu0 %v953
    %955 = vmatprep.subr.mxu0 0.0
    %v956 = vand.u32 %v904, 4294901760
    %957 = vmatpush1.msra.mxu0 %v956
    %958 = vmatprep.subr.mxu0 0.0
    %959 = vmatpush1.msra.mxu0 0.0
    %960 = vmatprep.subr.mxu0 0.0
    %961 = vmatpush1.msra.mxu0 0.0
    %962 = vmatprep.subr.mxu0 0.0
    %963 = vmatpush1.msra.mxu0 0.0
    %964 = vmatprep.subr.mxu0 0.0
    %965 = vmatpush1.msra.mxu0 0.0
    %966 = vmatprep.subr.mxu0 0.0
    %967 = vmatpush1.msra.mxu0 0.0
    %968 = vmatprep.subr.mxu0 0.0
    %969 = vmatpush1.msra.mxu0 0.0
    %970 = vmatprep.subr.mxu0 0.0
    %971 = vmatpush1.msra.mxu0 0.0
    %972 = vmatprep.subr.mxu0 0.0
    %973 = vmatpush1.msra.mxu0 0.0
    %974 = vmatprep.subr.mxu0 0.0
    %975 = vmatpush1.msra.mxu0 0.0
    %976 = vmatprep.subr.mxu0 0.0
    %977 = vmatpush1.msra.mxu0 0.0
    %978 = vmatprep.subr.mxu0 0.0
    %979 = vmatpush1.msra.mxu0 0.0
    %980 = vmatprep.subr.mxu0 0.0
    %981 = vmatpush1.msra.mxu0 0.0
    %982 = vmatprep.subr.mxu0 0.0
    %983 = vmatpush1.msra.mxu0 0.0
    %984 = vmatprep.subr.mxu0 0.0
    %985 = vmatpush1.msra.mxu0 0.0
    %986 = vmatprep.subr.mxu0 0.0
    %987 = vmatpush1.msra.mxu0 0.0
    %988 = vmatprep.subr.mxu0 0.0
    %989 = vmatpush1.msra.mxu0 0.0
    %990 = vmatprep.subr.mxu0 0.0
    %991 = vmatpush1.msra.mxu0 0.0
    %992 = vmatprep.subr.mxu0 0.0
    %993 = vmatpush1.msra.mxu0 0.0
    %994 = vmatprep.subr.mxu0 0.0
    %995 = vmatpush1.msra.mxu0 0.0
    %996 = vmatprep.subr.mxu0 0.0
    %997 = vmatpush1.msra.mxu0 0.0
    %998 = vmatprep.subr.mxu0 0.0
    %999 = vmatpush1.msra.mxu0 0.0
    %1000 = vmatprep.subr.mxu0 0.0
    %1001 = vmatpush1.msra.mxu0 0.0
    %1002 = vmatprep.subr.mxu0 0.0
    %1003 = vmatpush1.msra.mxu0 0.0
    %1004 = vmatprep.subr.mxu0 0.0
    %1005 = vmatpush1.msra.mxu0 0.0
    %1006 = vmatprep.subr.mxu0 0.0
    %1007 = vmatpush1.msra.mxu0 0.0
    %1008 = vmatprep.subr.mxu0 0.0
    %1009 = vmatpush1.msra.mxu0 0.0
    %1010 = vmatprep.subr.mxu0 0.0
    %1011 = vmatpush1.msra.mxu0 0.0
    %1012 = vmatprep.subr.mxu0 0.0
    %1013 = vmatpush1.msra.mxu0 0.0
    %1014 = vmatprep.mubr.f32.mxu0 0.0
    %v1015 = vand.u32 %v935, 4294901760
    %v1016 = vsub.f32 %v935, %v1015
    %v1017 = vand.u32 %v1016, 4294901760
    %v1018 = vsub.f32 %v1016, %v1017
    %v1019 = vand.u32 %v1018, 4294901760
    %1020 = vmatmul.mubr.f32.gmra.mrb[0].mxu0 %v1019
    %v1021 = vpop.f32.mrb[0].mxu0
    %v1022 = vadd.f32 %v916, %v1021
    %v1023 = vpop.f32.mrb[0].mxu0
    %1024 = vmatprep.mubr.f32.mxu0 0.0
    %v1025 = vand.u32 %v938, 4294901760
    %v1026 = vsub.f32 %v938, %v1025
    %v1027 = vand.u32 %v1026, 4294901760
    %v1028 = vsub.f32 %v1026, %v1027
    %v1029 = vand.u32 %v1028, 4294901760
    %1030 = vmatmul.mubr.f32.gmra.mrb[0].mxu0 %v1029
    %v1031 = vpop.f32.mrb[0].mxu0
    %v1032 = vadd.f32 %v921, %v1031
    %v1033 = vpop.f32.mrb[0].mxu0
    %1034 = vmatprep.mubr.f32.mxu0 0.0
    %v1035 = vand.u32 %v941, 4294901760
    %v1036 = vsub.f32 %v941, %v1035
    %v1037 = vand.u32 %v1036, 4294901760
    %v1038 = vsub.f32 %v1036, %v1037
    %v1039 = vand.u32 %v1038, 4294901760
    %1040 = vmatmul.mubr.f32.gmra.mrb[0].mxu0 %v1039
    %v1041 = vpop.f32.mrb[0].mxu0
    %v1042 = vadd.f32 %v926, %v1041
    %v1043 = vpop.f32.mrb[0].mxu0
    %1044 = vmatprep.mubr.f32.mxu0 0.0
    %v1045 = vand.u32 %v944, 4294901760
    %v1046 = vsub.f32 %v944, %v1045
    %v1047 = vand.u32 %v1046, 4294901760
    %v1048 = vsub.f32 %v1046, %v1047
    %v1049 = vand.u32 %v1048, 4294901760
    %1050 = vmatmul.mubr.f32.gmra.mrb[0].mxu0 %v1049
    %v1051 = vpop.f32.mrb[0].mxu0
    %v1052 = vadd.f32 %v931, %v1051
    %v1053 = vpop.f32.mrb[0].mxu0
    %1054 = vdwg.mxu0
    %1055 = vmatprep.subr.mxu0 0.0
    %v1056 = vand.u32 %v901, 4294901760
    %v1057 = vsub.f32 %v901, %v1056
    %v1058 = vand.u32 %v1057, 4294901760
    %v1059 = vsub.f32 %v1057, %v1058
    %v1060 = vand.u32 %v1059, 4294901760
    %1061 = vmatpush1.msra.mxu0 %v1060
    %1062 = vmatprep.subr.mxu0 0.0
    %v1063 = vand.u32 %v902, 4294901760
    %v1064 = vsub.f32 %v902, %v1063
    %v1065 = vand.u32 %v1064, 4294901760
    %v1066 = vsub.f32 %v1064, %v1065
    %v1067 = vand.u32 %v1066, 4294901760
    %1068 = vmatpush1.msra.mxu0 %v1067
    %1069 = vmatprep.subr.mxu0 0.0
    %v1070 = vand.u32 %v903, 4294901760
    %v1071 = vsub.f32 %v903, %v1070
    %v1072 = vand.u32 %v1071, 4294901760
    %v1073 = vsub.f32 %v1071, %v1072
    %v1074 = vand.u32 %v1073, 4294901760
    %1075 = vmatpush1.msra.mxu0 %v1074
    %1076 = vmatprep.subr.mxu0 0.0
    %v1077 = vand.u32 %v904, 4294901760
    %v1078 = vsub.f32 %v904, %v1077
    %v1079 = vand.u32 %v1078, 4294901760
    %v1080 = vsub.f32 %v1078, %v1079
    %v1081 = vand.u32 %v1080, 4294901760
    %1082 = vmatpush1.msra.mxu0 %v1081
    %1083 = vmatprep.subr.mxu0 0.0
    %1084 = vmatpush1.msra.mxu0 0.0
    %1085 = vmatprep.subr.mxu0 0.0
    %1086 = vmatpush1.msra.mxu0 0.0
    %1087 = vmatprep.subr.mxu0 0.0
    %1088 = vmatpush1.msra.mxu0 0.0
    %1089 = vmatprep.subr.mxu0 0.0
    %1090 = vmatpush1.msra.mxu0 0.0
    %1091 = vmatprep.subr.mxu0 0.0
    %1092 = vmatpush1.msra.mxu0 0.0
    %1093 = vmatprep.subr.mxu0 0.0
    %1094 = vmatpush1.msra.mxu0 0.0
    %1095 = vmatprep.subr.mxu0 0.0
    %1096 = vmatpush1.msra.mxu0 0.0
    %1097 = vmatprep.subr.mxu0 0.0
    %1098 = vmatpush1.msra.mxu0 0.0
    %1099 = vmatprep.subr.mxu0 0.0
    %1100 = vmatpush1.msra.mxu0 0.0
    %1101 = vmatprep.subr.mxu0 0.0
    %1102 = vmatpush1.msra.mxu0 0.0
    %1103 = vmatprep.subr.mxu0 0.0
    %1104 = vmatpush1.msra.mxu0 0.0
    %1105 = vmatprep.subr.mxu0 0.0
    %1106 = vmatpush1.msra.mxu0 0.0
    %1107 = vmatprep.subr.mxu0 0.0
    %1108 = vmatpush1.msra.mxu0 0.0
    %1109 = vmatprep.subr.mxu0 0.0
    %1110 = vmatpush1.msra.mxu0 0.0
    %1111 = vmatprep.subr.mxu0 0.0
    %1112 = vmatpush1.msra.mxu0 0.0
    %1113 = vmatprep.subr.mxu0 0.0
    %1114 = vmatpush1.msra.mxu0 0.0
    %1115 = vmatprep.subr.mxu0 0.0
    %1116 = vmatpush1.msra.mxu0 0.0
    %1117 = vmatprep.subr.mxu0 0.0
    %1118 = vmatpush1.msra.mxu0 0.0
    %1119 = vmatprep.subr.mxu0 0.0
    %1120 = vmatpush1.msra.mxu0 0.0
    %1121 = vmatprep.subr.mxu0 0.0
    %1122 = vmatpush1.msra.mxu0 0.0
    %1123 = vmatprep.subr.mxu0 0.0
    %1124 = vmatpush1.msra.mxu0 0.0
    %1125 = vmatprep.subr.mxu0 0.0
    %1126 = vmatpush1.msra.mxu0 0.0
    %1127 = vmatprep.subr.mxu0 0.0
    %1128 = vmatpush1.msra.mxu0 0.0
    %1129 = vmatprep.subr.mxu0 0.0
    %1130 = vmatpush1.msra.mxu0 0.0
    %1131 = vmatprep.subr.mxu0 0.0
    %1132 = vmatpush1.msra.mxu0 0.0
    %1133 = vmatprep.subr.mxu0 0.0
    %1134 = vmatpush1.msra.mxu0 0.0
    %1135 = vmatprep.subr.mxu0 0.0
    %1136 = vmatpush1.msra.mxu0 0.0
    %1137 = vmatprep.subr.mxu0 0.0
    %1138 = vmatpush1.msra.mxu0 0.0
    %1139 = vmatprep.mubr.f32.mxu0 0.0
    %v1140 = vand.u32 %v935, 4294901760
    %1141 = vmatmul.mubr.f32.gmra.mrb[0].mxu0 %v1140
    %v1142 = vpop.f32.mrb[0].mxu0
    %v1143 = vadd.f32 %v1022, %v1142
    %v1144 = vpop.f32.mrb[0].mxu0
    %1145 = vmatprep.mubr.f32.mxu0 0.0
    %v1146 = vand.u32 %v938, 4294901760
    %1147 = vmatmul.mubr.f32.gmra.mrb[0].mxu0 %v1146
    %v1148 = vpop.f32.mrb[0].mxu0
    %v1149 = vadd.f32 %v1032, %v1148
    %v1150 = vpop.f32.mrb[0].mxu0
    %1151 = vmatprep.mubr.f32.mxu0 0.0
    %v1152 = vand.u32 %v941, 4294901760
    %1153 = vmatmul.mubr.f32.gmra.mrb[0].mxu0 %v1152
    %v1154 = vpop.f32.mrb[0].mxu0
    %v1155 = vadd.f32 %v1042, %v1154
    %v1156 = vpop.f32.mrb[0].mxu0
    %1157 = vmatprep.mubr.f32.mxu0 0.0
    %v1158 = vand.u32 %v944, 4294901760
    %1159 = vmatmul.mubr.f32.gmra.mrb[0].mxu0 %v1158
    %v1160 = vpop.f32.mrb[0].mxu0
    %v1161 = vadd.f32 %v1052, %v1160
    %v1162 = vpop.f32.mrb[0].mxu0
    %1163 = vdwg.mxu0
    %1164 = vmatprep.subr.mxu0 0.0
    %v1165 = vand.u32 %v901, 4294901760
    %v1166 = vsub.f32 %v901, %v1165
    %1167 = vmatpush1.msra.mxu0 %v1166
    %1168 = vmatprep.subr.mxu0 0.0
    %v1169 = vand.u32 %v902, 4294901760
    %v1170 = vsub.f32 %v902, %v1169
    %1171 = vmatpush1.msra.mxu0 %v1170
    %1172 = vmatprep.subr.mxu0 0.0
    %v1173 = vand.u32 %v903, 4294901760
    %v1174 = vsub.f32 %v903, %v1173
    %1175 = vmatpush1.msra.mxu0 %v1174
    %1176 = vmatprep.subr.mxu0 0.0
    %v1177 = vand.u32 %v904, 4294901760
    %v1178 = vsub.f32 %v904, %v1177
    %1179 = vmatpush1.msra.mxu0 %v1178
    %1180 = vmatprep.subr.mxu0 0.0
    %1181 = vmatpush1.msra.mxu0 0.0
    %1182 = vmatprep.subr.mxu0 0.0
    %1183 = vmatpush1.msra.mxu0 0.0
    %1184 = vmatprep.subr.mxu0 0.0
    %1185 = vmatpush1.msra.mxu0 0.0
    %1186 = vmatprep.subr.mxu0 0.0
    %1187 = vmatpush1.msra.mxu0 0.0
    %1188 = vmatprep.subr.mxu0 0.0
    %1189 = vmatpush1.msra.mxu0 0.0
    %1190 = vmatprep.subr.mxu0 0.0
    %1191 = vmatpush1.msra.mxu0 0.0
    %1192 = vmatprep.subr.mxu0 0.0
    %1193 = vmatpush1.msra.mxu0 0.0
    %1194 = vmatprep.subr.mxu0 0.0
    %1195 = vmatpush1.msra.mxu0 0.0
    %1196 = vmatprep.subr.mxu0 0.0
    %1197 = vmatpush1.msra.mxu0 0.0
    %1198 = vmatprep.subr.mxu0 0.0
    %1199 = vmatpush1.msra.mxu0 0.0
    %1200 = vmatprep.subr.mxu0 0.0
    %1201 = vmatpush1.msra.mxu0 0.0
    %1202 = vmatprep.subr.mxu0 0.0
    %1203 = vmatpush1.msra.mxu0 0.0
    %1204 = vmatprep.subr.mxu0 0.0
    %1205 = vmatpush1.msra.mxu0 0.0
    %1206 = vmatprep.subr.mxu0 0.0
    %1207 = vmatpush1.msra.mxu0 0.0
    %1208 = vmatprep.subr.mxu0 0.0
    %1209 = vmatpush1.msra.mxu0 0.0
    %1210 = vmatprep.subr.mxu0 0.0
    %1211 = vmatpush1.msra.mxu0 0.0
    %1212 = vmatprep.subr.mxu0 0.0
    %1213 = vmatpush1.msra.mxu0 0.0
    %1214 = vmatprep.subr.mxu0 0.0
    %1215 = vmatpush1.msra.mxu0 0.0
    %1216 = vmatprep.subr.mxu0 0.0
    %1217 = vmatpush1.msra.mxu0 0.0
    %1218 = vmatprep.subr.mxu0 0.0
    %1219 = vmatpush1.msra.mxu0 0.0
    %1220 = vmatprep.subr.mxu0 0.0
    %1221 = vmatpush1.msra.mxu0 0.0
    %1222 = vmatprep.subr.mxu0 0.0
    %1223 = vmatpush1.msra.mxu0 0.0
    %1224 = vmatprep.subr.mxu0 0.0
    %1225 = vmatpush1.msra.mxu0 0.0
    %1226 = vmatprep.subr.mxu0 0.0
    %1227 = vmatpush1.msra.mxu0 0.0
    %1228 = vmatprep.subr.mxu0 0.0
    %1229 = vmatpush1.msra.mxu0 0.0
    %1230 = vmatprep.subr.mxu0 0.0
    %1231 = vmatpush1.msra.mxu0 0.0
    %1232 = vmatprep.subr.mxu0 0.0
    %1233 = vmatpush1.msra.mxu0 0.0
    %1234 = vmatprep.subr.mxu0 0.0
    %1235 = vmatpush1.msra.mxu0 0.0
    %1236 = vmatprep.mubr.f32.mxu0 0.0
    %v1237 = vand.u32 %v935, 4294901760
    %v1238 = vsub.f32 %v935, %v1237
    %1239 = vmatmul.mubr.f32.gmra.mrb[0].mxu0 %v1238
    %v1240 = vpop.f32.mrb[0].mxu0
    %v1241 = vadd.f32 %v1143, %v1240
    %v1242 = vpop.f32.mrb[0].mxu0
    %1243 = vmatprep.mubr.f32.mxu0 0.0
    %v1244 = vand.u32 %v938, 4294901760
    %v1245 = vsub.f32 %v938, %v1244
    %1246 = vmatmul.mubr.f32.gmra.mrb[0].mxu0 %v1245
    %v1247 = vpop.f32.mrb[0].mxu0
    %v1248 = vadd.f32 %v1149, %v1247
    %v1249 = vpop.f32.mrb[0].mxu0
    %1250 = vmatprep.mubr.f32.mxu0 0.0
    %v1251 = vand.u32 %v941, 4294901760
    %v1252 = vsub.f32 %v941, %v1251
    %1253 = vmatmul.mubr.f32.gmra.mrb[0].mxu0 %v1252
    %v1254 = vpop.f32.mrb[0].mxu0
    %v1255 = vadd.f32 %v1155, %v1254
    %v1256 = vpop.f32.mrb[0].mxu0
    %1257 = vmatprep.mubr.f32.mxu0 0.0
    %v1258 = vand.u32 %v944, 4294901760
    %v1259 = vsub.f32 %v944, %v1258
    %1260 = vmatmul.mubr.f32.gmra.mrb[0].mxu0 %v1259
    %v1261 = vpop.f32.mrb[0].mxu0
    %v1262 = vadd.f32 %v1161, %v1261
    %v1263 = vpop.f32.mrb[0].mxu0
    %1264 = vdwg.mxu0
    %1265 = vmatprep.subr.mxu0 0.0
    %v1266 = vand.u32 %v901, 4294901760
    %1267 = vmatpush1.msra.mxu0 %v1266
    %1268 = vmatprep.subr.mxu0 0.0
    %v1269 = vand.u32 %v902, 4294901760
    %1270 = vmatpush1.msra.mxu0 %v1269
    %1271 = vmatprep.subr.mxu0 0.0
    %v1272 = vand.u32 %v903, 4294901760
    %1273 = vmatpush1.msra.mxu0 %v1272
    %1274 = vmatprep.subr.mxu0 0.0
    %v1275 = vand.u32 %v904, 4294901760
    %1276 = vmatpush1.msra.mxu0 %v1275
    %1277 = vmatprep.subr.mxu0 0.0
    %1278 = vmatpush1.msra.mxu0 0.0
    %1279 = vmatprep.subr.mxu0 0.0
    %1280 = vmatpush1.msra.mxu0 0.0
    %1281 = vmatprep.subr.mxu0 0.0
    %1282 = vmatpush1.msra.mxu0 0.0
    %1283 = vmatprep.subr.mxu0 0.0
    %1284 = vmatpush1.msra.mxu0 0.0
    %1285 = vmatprep.subr.mxu0 0.0
    %1286 = vmatpush1.msra.mxu0 0.0
    %1287 = vmatprep.subr.mxu0 0.0
    %1288 = vmatpush1.msra.mxu0 0.0
    %1289 = vmatprep.subr.mxu0 0.0
    %1290 = vmatpush1.msra.mxu0 0.0
    %1291 = vmatprep.subr.mxu0 0.0
    %1292 = vmatpush1.msra.mxu0 0.0
    %1293 = vmatprep.subr.mxu0 0.0
    %1294 = vmatpush1.msra.mxu0 0.0
    %1295 = vmatprep.subr.mxu0 0.0
    %1296 = vmatpush1.msra.mxu0 0.0
    %1297 = vmatprep.subr.mxu0 0.0
    %1298 = vmatpush1.msra.mxu0 0.0
    %1299 = vmatprep.subr.mxu0 0.0
    %1300 = vmatpush1.msra.mxu0 0.0
    %1301 = vmatprep.subr.mxu0 0.0
    %1302 = vmatpush1.msra.mxu0 0.0
    %1303 = vmatprep.subr.mxu0 0.0
    %1304 = vmatpush1.msra.mxu0 0.0
    %1305 = vmatprep.subr.mxu0 0.0
    %1306 = vmatpush1.msra.mxu0 0.0
    %1307 = vmatprep.subr.mxu0 0.0
    %1308 = vmatpush1.msra.mxu0 0.0
    %1309 = vmatprep.subr.mxu0 0.0
    %1310 = vmatpush1.msra.mxu0 0.0
    %1311 = vmatprep.subr.mxu0 0.0
    %1312 = vmatpush1.msra.mxu0 0.0
    %1313 = vmatprep.subr.mxu0 0.0
    %1314 = vmatpush1.msra.mxu0 0.0
    %1315 = vmatprep.subr.mxu0 0.0
    %1316 = vmatpush1.msra.mxu0 0.0
    %1317 = vmatprep.subr.mxu0 0.0
    %1318 = vmatpush1.msra.mxu0 0.0
    %1319 = vmatprep.subr.mxu0 0.0
    %1320 = vmatpush1.msra.mxu0 0.0
    %1321 = vmatprep.subr.mxu0 0.0
    %1322 = vmatpush1.msra.mxu0 0.0
    %1323 = vmatprep.subr.mxu0 0.0
    %1324 = vmatpush1.msra.mxu0 0.0
    %1325 = vmatprep.subr.mxu0 0.0
    %1326 = vmatpush1.msra.mxu0 0.0
    %1327 = vmatprep.subr.mxu0 0.0
    %1328 = vmatpush1.msra.mxu0 0.0
    %1329 = vmatprep.subr.mxu0 0.0
    %1330 = vmatpush1.msra.mxu0 0.0
    %1331 = vmatprep.subr.mxu0 0.0
    %1332 = vmatpush1.msra.mxu0 0.0
    %1333 = vmatprep.mubr.f32.mxu0 0.0
    %v1334 = vand.u32 %v935, 4294901760
    %v1335 = vsub.f32 %v935, %v1334
    %v1336 = vand.u32 %v1335, 4294901760
    %1337 = vmatmul.mubr.f32.gmra.mrb[0].mxu0 %v1336
    %v1338 = vpop.f32.mrb[0].mxu0
    %v1339 = vadd.f32 %v1241, %v1338
    %v1340 = vpop.f32.mrb[0].mxu0
    %1341 = vmatprep.mubr.f32.mxu0 0.0
    %v1342 = vand.u32 %v938, 4294901760
    %v1343 = vsub.f32 %v938, %v1342
    %v1344 = vand.u32 %v1343, 4294901760
    %1345 = vmatmul.mubr.f32.gmra.mrb[0].mxu0 %v1344
    %v1346 = vpop.f32.mrb[0].mxu0
    %v1347 = vadd.f32 %v1248, %v1346
    %v1348 = vpop.f32.mrb[0].mxu0
    %1349 = vmatprep.mubr.f32.mxu0 0.0
    %v1350 = vand.u32 %v941, 4294901760
    %v1351 = vsub.f32 %v941, %v1350
    %v1352 = vand.u32 %v1351, 4294901760
    %1353 = vmatmul.mubr.f32.gmra.mrb[0].mxu0 %v1352
    %v1354 = vpop.f32.mrb[0].mxu0
    %v1355 = vadd.f32 %v1255, %v1354
    %v1356 = vpop.f32.mrb[0].mxu0
    %1357 = vmatprep.mubr.f32.mxu0 0.0
    %v1358 = vand.u32 %v944, 4294901760
    %v1359 = vsub.f32 %v944, %v1358
    %v1360 = vand.u32 %v1359, 4294901760
    %1361 = vmatmul.mubr.f32.gmra.mrb[0].mxu0 %v1360
    %v1362 = vpop.f32.mrb[0].mxu0
    %v1363 = vadd.f32 %v1262, %v1362
    %v1364 = vpop.f32.mrb[0].mxu0
    %1365 = vdwg.mxu0
    %1366 = vmatprep.subr.mxu0 0.0
    %v1367 = vand.u32 %v901, 4294901760
    %v1368 = vsub.f32 %v901, %v1367
    %v1369 = vand.u32 %v1368, 4294901760
    %1370 = vmatpush1.msra.mxu0 %v1369
    %1371 = vmatprep.subr.mxu0 0.0
    %v1372 = vand.u32 %v902, 4294901760
    %v1373 = vsub.f32 %v902, %v1372
    %v1374 = vand.u32 %v1373, 4294901760
    %1375 = vmatpush1.msra.mxu0 %v1374
    %1376 = vmatprep.subr.mxu0 0.0
    %v1377 = vand.u32 %v903, 4294901760
    %v1378 = vsub.f32 %v903, %v1377
    %v1379 = vand.u32 %v1378, 4294901760
    %1380 = vmatpush1.msra.mxu0 %v1379
    %1381 = vmatprep.subr.mxu0 0.0
    %v1382 = vand.u32 %v904, 4294901760
    %v1383 = vsub.f32 %v904, %v1382
    %v1384 = vand.u32 %v1383, 4294901760
    %1385 = vmatpush1.msra.mxu0 %v1384
    %1386 = vmatprep.subr.mxu0 0.0
    %1387 = vmatpush1.msra.mxu0 0.0
    %1388 = vmatprep.subr.mxu0 0.0
    %1389 = vmatpush1.msra.mxu0 0.0
    %1390 = vmatprep.subr.mxu0 0.0
    %1391 = vmatpush1.msra.mxu0 0.0
    %1392 = vmatprep.subr.mxu0 0.0
    %1393 = vmatpush1.msra.mxu0 0.0
    %1394 = vmatprep.subr.mxu0 0.0
    %1395 = vmatpush1.msra.mxu0 0.0
    %1396 = vmatprep.subr.mxu0 0.0
    %1397 = vmatpush1.msra.mxu0 0.0
    %1398 = vmatprep.subr.mxu0 0.0
    %1399 = vmatpush1.msra.mxu0 0.0
    %1400 = vmatprep.subr.mxu0 0.0
    %1401 = vmatpush1.msra.mxu0 0.0
    %1402 = vmatprep.subr.mxu0 0.0
    %1403 = vmatpush1.msra.mxu0 0.0
    %1404 = vmatprep.subr.mxu0 0.0
    %1405 = vmatpush1.msra.mxu0 0.0
    %1406 = vmatprep.subr.mxu0 0.0
    %1407 = vmatpush1.msra.mxu0 0.0
    %1408 = vmatprep.subr.mxu0 0.0
    %1409 = vmatpush1.msra.mxu0 0.0
    %1410 = vmatprep.subr.mxu0 0.0
    %1411 = vmatpush1.msra.mxu0 0.0
    %1412 = vmatprep.subr.mxu0 0.0
    %1413 = vmatpush1.msra.mxu0 0.0
    %1414 = vmatprep.subr.mxu0 0.0
    %1415 = vmatpush1.msra.mxu0 0.0
    %1416 = vmatprep.subr.mxu0 0.0
    %1417 = vmatpush1.msra.mxu0 0.0
    %1418 = vmatprep.subr.mxu0 0.0
    %1419 = vmatpush1.msra.mxu0 0.0
    %1420 = vmatprep.subr.mxu0 0.0
    %1421 = vmatpush1.msra.mxu0 0.0
    %1422 = vmatprep.subr.mxu0 0.0
    %1423 = vmatpush1.msra.mxu0 0.0
    %1424 = vmatprep.subr.mxu0 0.0
    %1425 = vmatpush1.msra.mxu0 0.0
    %1426 = vmatprep.subr.mxu0 0.0
    %1427 = vmatpush1.msra.mxu0 0.0
    %1428 = vmatprep.subr.mxu0 0.0
    %1429 = vmatpush1.msra.mxu0 0.0
    %1430 = vmatprep.subr.mxu0 0.0
    %1431 = vmatpush1.msra.mxu0 0.0
    %1432 = vmatprep.subr.mxu0 0.0
    %1433 = vmatpush1.msra.mxu0 0.0
    %1434 = vmatprep.subr.mxu0 0.0
    %1435 = vmatpush1.msra.mxu0 0.0
    %1436 = vmatprep.subr.mxu0 0.0
    %1437 = vmatpush1.msra.mxu0 0.0
    %1438 = vmatprep.subr.mxu0 0.0
    %1439 = vmatpush1.msra.mxu0 0.0
    %1440 = vmatprep.subr.mxu0 0.0
    %1441 = vmatpush1.msra.mxu0 0.0
    %1442 = vmatprep.mubr.f32.mxu0 0.0
    %v1443 = vand.u32 %v935, 4294901760
    %1444 = vmatmul.mubr.f32.gmra.mrb[0].mxu0 %v1443
    %v1445 = vpop.f32.mrb[0].mxu0
    %v1446 = vadd.f32 %v1339, %v1445
    %v1447 = vpop.f32.mrb[0].mxu0
    %1448 = vmatprep.mubr.f32.mxu0 0.0
    %v1449 = vand.u32 %v938, 4294901760
    %1450 = vmatmul.mubr.f32.gmra.mrb[0].mxu0 %v1449
    %v1451 = vpop.f32.mrb[0].mxu0
    %v1452 = vadd.f32 %v1347, %v1451
    %v1453 = vpop.f32.mrb[0].mxu0
    %1454 = vmatprep.mubr.f32.mxu0 0.0
    %v1455 = vand.u32 %v941, 4294901760
    %1456 = vmatmul.mubr.f32.gmra.mrb[0].mxu0 %v1455
    %v1457 = vpop.f32.mrb[0].mxu0
    %v1458 = vadd.f32 %v1355, %v1457
    %v1459 = vpop.f32.mrb[0].mxu0
    %1460 = vmatprep.mubr.f32.mxu0 0.0
    %v1461 = vand.u32 %v944, 4294901760
    %1462 = vmatmul.mubr.f32.gmra.mrb[0].mxu0 %v1461
    %v1463 = vpop.f32.mrb[0].mxu0
    %v1464 = vadd.f32 %v1363, %v1463
    %v1465 = vpop.f32.mrb[0].mxu0
    %1466 = vdwg.mxu0
    %1467 = vmatprep.subr.mxu0 0.0
    %v1468 = vand.u32 %v901, 4294901760
    %1469 = vmatpush1.msra.mxu0 %v1468
    %1470 = vmatprep.subr.mxu0 0.0
    %v1471 = vand.u32 %v902, 4294901760
    %1472 = vmatpush1.msra.mxu0 %v1471
    %1473 = vmatprep.subr.mxu0 0.0
    %v1474 = vand.u32 %v903, 4294901760
    %1475 = vmatpush1.msra.mxu0 %v1474
    %1476 = vmatprep.subr.mxu0 0.0
    %v1477 = vand.u32 %v904, 4294901760
    %1478 = vmatpush1.msra.mxu0 %v1477
    %1479 = vmatprep.subr.mxu0 0.0
    %1480 = vmatpush1.msra.mxu0 0.0
    %1481 = vmatprep.subr.mxu0 0.0
    %1482 = vmatpush1.msra.mxu0 0.0
    %1483 = vmatprep.subr.mxu0 0.0
    %1484 = vmatpush1.msra.mxu0 0.0
    %1485 = vmatprep.subr.mxu0 0.0
    %1486 = vmatpush1.msra.mxu0 0.0
    %1487 = vmatprep.subr.mxu0 0.0
    %1488 = vmatpush1.msra.mxu0 0.0
    %1489 = vmatprep.subr.mxu0 0.0
    %1490 = vmatpush1.msra.mxu0 0.0
    %1491 = vmatprep.subr.mxu0 0.0
    %1492 = vmatpush1.msra.mxu0 0.0
    %1493 = vmatprep.subr.mxu0 0.0
    %1494 = vmatpush1.msra.mxu0 0.0
    %1495 = vmatprep.subr.mxu0 0.0
    %1496 = vmatpush1.msra.mxu0 0.0
    %1497 = vmatprep.subr.mxu0 0.0
    %1498 = vmatpush1.msra.mxu0 0.0
    %1499 = vmatprep.subr.mxu0 0.0
    %1500 = vmatpush1.msra.mxu0 0.0
    %1501 = vmatprep.subr.mxu0 0.0
    %1502 = vmatpush1.msra.mxu0 0.0
    %1503 = vmatprep.subr.mxu0 0.0
    %1504 = vmatpush1.msra.mxu0 0.0
    %1505 = vmatprep.subr.mxu0 0.0
    %1506 = vmatpush1.msra.mxu0 0.0
    %1507 = vmatprep.subr.mxu0 0.0
    %1508 = vmatpush1.msra.mxu0 0.0
    %1509 = vmatprep.subr.mxu0 0.0
    %1510 = vmatpush1.msra.mxu0 0.0
    %1511 = vmatprep.subr.mxu0 0.0
    %1512 = vmatpush1.msra.mxu0 0.0
    %1513 = vmatprep.subr.mxu0 0.0
    %1514 = vmatpush1.msra.mxu0 0.0
    %1515 = vmatprep.subr.mxu0 0.0
    %1516 = vmatpush1.msra.mxu0 0.0
    %1517 = vmatprep.subr.mxu0 0.0
    %1518 = vmatpush1.msra.mxu0 0.0
    %1519 = vmatprep.subr.mxu0 0.0
    %1520 = vmatpush1.msra.mxu0 0.0
    %1521 = vmatprep.subr.mxu0 0.0
    %1522 = vmatpush1.msra.mxu0 0.0
    %1523 = vmatprep.subr.mxu0 0.0
    %1524 = vmatpush1.msra.mxu0 0.0
    %1525 = vmatprep.subr.mxu0 0.0
    %1526 = vmatpush1.msra.mxu0 0.0
    %1527 = vmatprep.subr.mxu0 0.0
    %1528 = vmatpush1.msra.mxu0 0.0
    %1529 = vmatprep.subr.mxu0 0.0
    %1530 = vmatpush1.msra.mxu0 0.0
    %1531 = vmatprep.subr.mxu0 0.0
    %1532 = vmatpush1.msra.mxu0 0.0
    %1533 = vmatprep.subr.mxu0 0.0
    %1534 = vmatpush1.msra.mxu0 0.0
    %1535 = vmatprep.mubr.f32.mxu0 0.0
    %v1536 = vand.u32 %v935, 4294901760
    %1537 = vmatmul.mubr.f32.gmra.mrb[0].mxu0 %v1536
    %v1538 = vpop.f32.mrb[0].mxu0
    %v1539 = vadd.f32 %v1446, %v1538
    %v1540 = vpop.f32.mrb[0].mxu0
    %1541 = vmatprep.mubr.f32.mxu0 0.0
    %v1542 = vand.u32 %v938, 4294901760
    %1543 = vmatmul.mubr.f32.gmra.mrb[0].mxu0 %v1542
    %v1544 = vpop.f32.mrb[0].mxu0
    %v1545 = vadd.f32 %v1452, %v1544
    %v1546 = vpop.f32.mrb[0].mxu0
    %1547 = vmatprep.mubr.f32.mxu0 0.0
    %v1548 = vand.u32 %v941, 4294901760
    %1549 = vmatmul.mubr.f32.gmra.mrb[0].mxu0 %v1548
    %v1550 = vpop.f32.mrb[0].mxu0
    %v1551 = vadd.f32 %v1458, %v1550
    %v1552 = vpop.f32.mrb[0].mxu0
    %1553 = vmatprep.mubr.f32.mxu0 0.0
    %v1554 = vand.u32 %v944, 4294901760
    %1555 = vmatmul.mubr.f32.gmra.mrb[0].mxu0 %v1554
    %v1556 = vpop.f32.mrb[0].mxu0
    %v1557 = vadd.f32 %v1464, %v1556
    %v1558 = vpop.f32.mrb[0].mxu0
    %1559 = vdwg.mxu0
    %v1560 = vmax.f32 %v1539, 0.0
    %v1561 = vmax.f32 %v1545, 0.0
    %v1562 = vmax.f32 %v1551, 0.0
    %v1563 = vmax.f32 %v1557, 0.0
    %v1564 = vld [vmem:[%s5] sm:$0xff]
    %v1565 = vld [vmem:[%s6] sm:$0xff]
    %1567 = vset.pattern.permute.xlu0 0
    %1568 = vperm.xlu0 %1567, %v1565
    %v1569 = vpop.permute.xlu0 %1568
    %v1572 = vsel %vm933, %v1564, 0
    %1574 = vmatprep.subr.mxu0 0.0
    %v1575 = vand.u32 %v1560, 4294901760
    %1576 = vmatpush1.msra.mxu0 %v1575
    %1577 = vmatprep.subr.mxu0 0.0
    %v1578 = vand.u32 %v1561, 4294901760
    %1579 = vmatpush1.msra.mxu0 %v1578
    %1580 = vmatprep.subr.mxu0 0.0
    %v1581 = vand.u32 %v1562, 4294901760
    %1582 = vmatpush1.msra.mxu0 %v1581
    %1583 = vmatprep.subr.mxu0 0.0
    %v1584 = vand.u32 %v1563, 4294901760
    %1585 = vmatpush1.msra.mxu0 %v1584
    %1586 = vmatprep.subr.mxu0 0.0
    %1587 = vmatpush1.msra.mxu0 0.0
    %1588 = vmatprep.subr.mxu0 0.0
    %1589 = vmatpush1.msra.mxu0 0.0
    %1590 = vmatprep.subr.mxu0 0.0
    %1591 = vmatpush1.msra.mxu0 0.0
    %1592 = vmatprep.subr.mxu0 0.0
    %1593 = vmatpush1.msra.mxu0 0.0
    %1594 = vmatprep.subr.mxu0 0.0
    %1595 = vmatpush1.msra.mxu0 0.0
    %1596 = vmatprep.subr.mxu0 0.0
    %1597 = vmatpush1.msra.mxu0 0.0
    %1598 = vmatprep.subr.mxu0 0.0
    %1599 = vmatpush1.msra.mxu0 0.0
    %1600 = vmatprep.subr.mxu0 0.0
    %1601 = vmatpush1.msra.mxu0 0.0
    %1602 = vmatprep.subr.mxu0 0.0
    %1603 = vmatpush1.msra.mxu0 0.0
    %1604 = vmatprep.subr.mxu0 0.0
    %1605 = vmatpush1.msra.mxu0 0.0
    %1606 = vmatprep.subr.mxu0 0.0
    %1607 = vmatpush1.msra.mxu0 0.0
    %1608 = vmatprep.subr.mxu0 0.0
    %1609 = vmatpush1.msra.mxu0 0.0
    %1610 = vmatprep.subr.mxu0 0.0
    %1611 = vmatpush1.msra.mxu0 0.0
    %1612 = vmatprep.subr.mxu0 0.0
    %1613 = vmatpush1.msra.mxu0 0.0
    %1614 = vmatprep.subr.mxu0 0.0
    %1615 = vmatpush1.msra.mxu0 0.0
    %1616 = vmatprep.subr.mxu0 0.0
    %1617 = vmatpush1.msra.mxu0 0.0
    %1618 = vmatprep.subr.mxu0 0.0
    %1619 = vmatpush1.msra.mxu0 0.0
    %1620 = vmatprep.subr.mxu0 0.0
    %1621 = vmatpush1.msra.mxu0 0.0
    %1622 = vmatprep.subr.mxu0 0.0
    %1623 = vmatpush1.msra.mxu0 0.0
    %1624 = vmatprep.subr.mxu0 0.0
    %1625 = vmatpush1.msra.mxu0 0.0
    %1626 = vmatprep.subr.mxu0 0.0
    %1627 = vmatpush1.msra.mxu0 0.0
    %1628 = vmatprep.subr.mxu0 0.0
    %1629 = vmatpush1.msra.mxu0 0.0
    %1630 = vmatprep.subr.mxu0 0.0
    %1631 = vmatpush1.msra.mxu0 0.0
    %1632 = vmatprep.subr.mxu0 0.0
    %1633 = vmatpush1.msra.mxu0 0.0
    %1634 = vmatprep.subr.mxu0 0.0
    %1635 = vmatpush1.msra.mxu0 0.0
    %1636 = vmatprep.subr.mxu0 0.0
    %1637 = vmatpush1.msra.mxu0 0.0
    %1638 = vmatprep.subr.mxu0 0.0
    %1639 = vmatpush1.msra.mxu0 0.0
    %1640 = vmatprep.subr.mxu0 0.0
    %1641 = vmatpush1.msra.mxu0 0.0
    %1642 = vmatprep.mubr.f32.mxu0 0.0
    %v1643 = vand.u32 %v1572, 4294901760
    %v1644 = vsub.f32 %v1572, %v1643
    %v1645 = vand.u32 %v1644, 4294901760
    %v1646 = vsub.f32 %v1644, %v1645
    %v1647 = vand.u32 %v1646, 4294901760
    %1648 = vmatmul.mubr.f32.gmra.mrb[0].mxu0 %v1647
    %v1649 = vpop.f32.mrb[0].mxu0
    %v1650 = vadd.f32 %v1569, %v1649
    %v1651 = vpop.f32.mrb[0].mxu0
    %1652 = vdwg.mxu0
    %1653 = vmatprep.subr.mxu0 0.0
    %v1654 = vand.u32 %v1560, 4294901760
    %v1655 = vsub.f32 %v1560, %v1654
    %v1656 = vand.u32 %v1655, 4294901760
    %v1657 = vsub.f32 %v1655, %v1656
    %v1658 = vand.u32 %v1657, 4294901760
    %1659 = vmatpush1.msra.mxu0 %v1658
    %1660 = vmatprep.subr.mxu0 0.0
    %v1661 = vand.u32 %v1561, 4294901760
    %v1662 = vsub.f32 %v1561, %v1661
    %v1663 = vand.u32 %v1662, 4294901760
    %v1664 = vsub.f32 %v1662, %v1663
    %v1665 = vand.u32 %v1664, 4294901760
    %1666 = vmatpush1.msra.mxu0 %v1665
    %1667 = vmatprep.subr.mxu0 0.0
    %v1668 = vand.u32 %v1562, 4294901760
    %v1669 = vsub.f32 %v1562, %v1668
    %v1670 = vand.u32 %v1669, 4294901760
    %v1671 = vsub.f32 %v1669, %v1670
    %v1672 = vand.u32 %v1671, 4294901760
    %1673 = vmatpush1.msra.mxu0 %v1672
    %1674 = vmatprep.subr.mxu0 0.0
    %v1675 = vand.u32 %v1563, 4294901760
    %v1676 = vsub.f32 %v1563, %v1675
    %v1677 = vand.u32 %v1676, 4294901760
    %v1678 = vsub.f32 %v1676, %v1677
    %v1679 = vand.u32 %v1678, 4294901760
    %1680 = vmatpush1.msra.mxu0 %v1679
    %1681 = vmatprep.subr.mxu0 0.0
    %1682 = vmatpush1.msra.mxu0 0.0
    %1683 = vmatprep.subr.mxu0 0.0
    %1684 = vmatpush1.msra.mxu0 0.0
    %1685 = vmatprep.subr.mxu0 0.0
    %1686 = vmatpush1.msra.mxu0 0.0
    %1687 = vmatprep.subr.mxu0 0.0
    %1688 = vmatpush1.msra.mxu0 0.0
    %1689 = vmatprep.subr.mxu0 0.0
    %1690 = vmatpush1.msra.mxu0 0.0
    %1691 = vmatprep.subr.mxu0 0.0
    %1692 = vmatpush1.msra.mxu0 0.0
    %1693 = vmatprep.subr.mxu0 0.0
    %1694 = vmatpush1.msra.mxu0 0.0
    %1695 = vmatprep.subr.mxu0 0.0
    %1696 = vmatpush1.msra.mxu0 0.0
    %1697 = vmatprep.subr.mxu0 0.0
    %1698 = vmatpush1.msra.mxu0 0.0
    %1699 = vmatprep.subr.mxu0 0.0
    %1700 = vmatpush1.msra.mxu0 0.0
    %1701 = vmatprep.subr.mxu0 0.0
    %1702 = vmatpush1.msra.mxu0 0.0
    %1703 = vmatprep.subr.mxu0 0.0
    %1704 = vmatpush1.msra.mxu0 0.0
    %1705 = vmatprep.subr.mxu0 0.0
    %1706 = vmatpush1.msra.mxu0 0.0
    %1707 = vmatprep.subr.mxu0 0.0
    %1708 = vmatpush1.msra.mxu0 0.0
    %1709 = vmatprep.subr.mxu0 0.0
    %1710 = vmatpush1.msra.mxu0 0.0
    %1711 = vmatprep.subr.mxu0 0.0
    %1712 = vmatpush1.msra.mxu0 0.0
    %1713 = vmatprep.subr.mxu0 0.0
    %1714 = vmatpush1.msra.mxu0 0.0
    %1715 = vmatprep.subr.mxu0 0.0
    %1716 = vmatpush1.msra.mxu0 0.0
    %1717 = vmatprep.subr.mxu0 0.0
    %1718 = vmatpush1.msra.mxu0 0.0
    %1719 = vmatprep.subr.mxu0 0.0
    %1720 = vmatpush1.msra.mxu0 0.0
    %1721 = vmatprep.subr.mxu0 0.0
    %1722 = vmatpush1.msra.mxu0 0.0
    %1723 = vmatprep.subr.mxu0 0.0
    %1724 = vmatpush1.msra.mxu0 0.0
    %1725 = vmatprep.subr.mxu0 0.0
    %1726 = vmatpush1.msra.mxu0 0.0
    %1727 = vmatprep.subr.mxu0 0.0
    %1728 = vmatpush1.msra.mxu0 0.0
    %1729 = vmatprep.subr.mxu0 0.0
    %1730 = vmatpush1.msra.mxu0 0.0
    %1731 = vmatprep.subr.mxu0 0.0
    %1732 = vmatpush1.msra.mxu0 0.0
    %1733 = vmatprep.subr.mxu0 0.0
    %1734 = vmatpush1.msra.mxu0 0.0
    %1735 = vmatprep.subr.mxu0 0.0
    %1736 = vmatpush1.msra.mxu0 0.0
    %1737 = vmatprep.mubr.f32.mxu0 0.0
    %v1738 = vand.u32 %v1572, 4294901760
    %1739 = vmatmul.mubr.f32.gmra.mrb[0].mxu0 %v1738
    %v1740 = vpop.f32.mrb[0].mxu0
    %v1741 = vadd.f32 %v1650, %v1740
    %v1742 = vpop.f32.mrb[0].mxu0
    %1743 = vdwg.mxu0
    %1744 = vmatprep.subr.mxu0 0.0
    %v1745 = vand.u32 %v1560, 4294901760
    %v1746 = vsub.f32 %v1560, %v1745
    %1747 = vmatpush1.msra.mxu0 %v1746
    %1748 = vmatprep.subr.mxu0 0.0
    %v1749 = vand.u32 %v1561, 4294901760
    %v1750 = vsub.f32 %v1561, %v1749
    %1751 = vmatpush1.msra.mxu0 %v1750
    %1752 = vmatprep.subr.mxu0 0.0
    %v1753 = vand.u32 %v1562, 4294901760
    %v1754 = vsub.f32 %v1562, %v1753
    %1755 = vmatpush1.msra.mxu0 %v1754
    %1756 = vmatprep.subr.mxu0 0.0
    %v1757 = vand.u32 %v1563, 4294901760
    %v1758 = vsub.f32 %v1563, %v1757
    %1759 = vmatpush1.msra.mxu0 %v1758
    %1760 = vmatprep.subr.mxu0 0.0
    %1761 = vmatpush1.msra.mxu0 0.0
    %1762 = vmatprep.subr.mxu0 0.0
    %1763 = vmatpush1.msra.mxu0 0.0
    %1764 = vmatprep.subr.mxu0 0.0
    %1765 = vmatpush1.msra.mxu0 0.0
    %1766 = vmatprep.subr.mxu0 0.0
    %1767 = vmatpush1.msra.mxu0 0.0
    %1768 = vmatprep.subr.mxu0 0.0
    %1769 = vmatpush1.msra.mxu0 0.0
    %1770 = vmatprep.subr.mxu0 0.0
    %1771 = vmatpush1.msra.mxu0 0.0
    %1772 = vmatprep.subr.mxu0 0.0
    %1773 = vmatpush1.msra.mxu0 0.0
    %1774 = vmatprep.subr.mxu0 0.0
    %1775 = vmatpush1.msra.mxu0 0.0
    %1776 = vmatprep.subr.mxu0 0.0
    %1777 = vmatpush1.msra.mxu0 0.0
    %1778 = vmatprep.subr.mxu0 0.0
    %1779 = vmatpush1.msra.mxu0 0.0
    %1780 = vmatprep.subr.mxu0 0.0
    %1781 = vmatpush1.msra.mxu0 0.0
    %1782 = vmatprep.subr.mxu0 0.0
    %1783 = vmatpush1.msra.mxu0 0.0
    %1784 = vmatprep.subr.mxu0 0.0
    %1785 = vmatpush1.msra.mxu0 0.0
    %1786 = vmatprep.subr.mxu0 0.0
    %1787 = vmatpush1.msra.mxu0 0.0
    %1788 = vmatprep.subr.mxu0 0.0
    %1789 = vmatpush1.msra.mxu0 0.0
    %1790 = vmatprep.subr.mxu0 0.0
    %1791 = vmatpush1.msra.mxu0 0.0
    %1792 = vmatprep.subr.mxu0 0.0
    %1793 = vmatpush1.msra.mxu0 0.0
    %1794 = vmatprep.subr.mxu0 0.0
    %1795 = vmatpush1.msra.mxu0 0.0
    %1796 = vmatprep.subr.mxu0 0.0
    %1797 = vmatpush1.msra.mxu0 0.0
    %1798 = vmatprep.subr.mxu0 0.0
    %1799 = vmatpush1.msra.mxu0 0.0
    %1800 = vmatprep.subr.mxu0 0.0
    %1801 = vmatpush1.msra.mxu0 0.0
    %1802 = vmatprep.subr.mxu0 0.0
    %1803 = vmatpush1.msra.mxu0 0.0
    %1804 = vmatprep.subr.mxu0 0.0
    %1805 = vmatpush1.msra.mxu0 0.0
    %1806 = vmatprep.subr.mxu0 0.0
    %1807 = vmatpush1.msra.mxu0 0.0
    %1808 = vmatprep.subr.mxu0 0.0
    %1809 = vmatpush1.msra.mxu0 0.0
    %1810 = vmatprep.subr.mxu0 0.0
    %1811 = vmatpush1.msra.mxu0 0.0
    %1812 = vmatprep.subr.mxu0 0.0
    %1813 = vmatpush1.msra.mxu0 0.0
    %1814 = vmatprep.subr.mxu0 0.0
    %1815 = vmatpush1.msra.mxu0 0.0
    %1816 = vmatprep.mubr.f32.mxu0 0.0
    %v1817 = vand.u32 %v1572, 4294901760
    %v1818 = vsub.f32 %v1572, %v1817
    %1819 = vmatmul.mubr.f32.gmra.mrb[0].mxu0 %v1818
    %v1820 = vpop.f32.mrb[0].mxu0
    %v1821 = vadd.f32 %v1741, %v1820
    %v1822 = vpop.f32.mrb[0].mxu0
    %1823 = vdwg.mxu0
    %1824 = vmatprep.subr.mxu0 0.0
    %v1825 = vand.u32 %v1560, 4294901760
    %1826 = vmatpush1.msra.mxu0 %v1825
    %1827 = vmatprep.subr.mxu0 0.0
    %v1828 = vand.u32 %v1561, 4294901760
    %1829 = vmatpush1.msra.mxu0 %v1828
    %1830 = vmatprep.subr.mxu0 0.0
    %v1831 = vand.u32 %v1562, 4294901760
    %1832 = vmatpush1.msra.mxu0 %v1831
    %1833 = vmatprep.subr.mxu0 0.0
    %v1834 = vand.u32 %v1563, 4294901760
    %1835 = vmatpush1.msra.mxu0 %v1834
    %1836 = vmatprep.subr.mxu0 0.0
    %1837 = vmatpush1.msra.mxu0 0.0
    %1838 = vmatprep.subr.mxu0 0.0
    %1839 = vmatpush1.msra.mxu0 0.0
    %1840 = vmatprep.subr.mxu0 0.0
    %1841 = vmatpush1.msra.mxu0 0.0
    %1842 = vmatprep.subr.mxu0 0.0
    %1843 = vmatpush1.msra.mxu0 0.0
    %1844 = vmatprep.subr.mxu0 0.0
    %1845 = vmatpush1.msra.mxu0 0.0
    %1846 = vmatprep.subr.mxu0 0.0
    %1847 = vmatpush1.msra.mxu0 0.0
    %1848 = vmatprep.subr.mxu0 0.0
    %1849 = vmatpush1.msra.mxu0 0.0
    %1850 = vmatprep.subr.mxu0 0.0
    %1851 = vmatpush1.msra.mxu0 0.0
    %1852 = vmatprep.subr.mxu0 0.0
    %1853 = vmatpush1.msra.mxu0 0.0
    %1854 = vmatprep.subr.mxu0 0.0
    %1855 = vmatpush1.msra.mxu0 0.0
    %1856 = vmatprep.subr.mxu0 0.0
    %1857 = vmatpush1.msra.mxu0 0.0
    %1858 = vmatprep.subr.mxu0 0.0
    %1859 = vmatpush1.msra.mxu0 0.0
    %1860 = vmatprep.subr.mxu0 0.0
    %1861 = vmatpush1.msra.mxu0 0.0
    %1862 = vmatprep.subr.mxu0 0.0
    %1863 = vmatpush1.msra.mxu0 0.0
    %1864 = vmatprep.subr.mxu0 0.0
    %1865 = vmatpush1.msra.mxu0 0.0
    %1866 = vmatprep.subr.mxu0 0.0
    %1867 = vmatpush1.msra.mxu0 0.0
    %1868 = vmatprep.subr.mxu0 0.0
    %1869 = vmatpush1.msra.mxu0 0.0
    %1870 = vmatprep.subr.mxu0 0.0
    %1871 = vmatpush1.msra.mxu0 0.0
    %1872 = vmatprep.subr.mxu0 0.0
    %1873 = vmatpush1.msra.mxu0 0.0
    %1874 = vmatprep.subr.mxu0 0.0
    %1875 = vmatpush1.msra.mxu0 0.0
    %1876 = vmatprep.subr.mxu0 0.0
    %1877 = vmatpush1.msra.mxu0 0.0
    %1878 = vmatprep.subr.mxu0 0.0
    %1879 = vmatpush1.msra.mxu0 0.0
    %1880 = vmatprep.subr.mxu0 0.0
    %1881 = vmatpush1.msra.mxu0 0.0
    %1882 = vmatprep.subr.mxu0 0.0
    %1883 = vmatpush1.msra.mxu0 0.0
    %1884 = vmatprep.subr.mxu0 0.0
    %1885 = vmatpush1.msra.mxu0 0.0
    %1886 = vmatprep.subr.mxu0 0.0
    %1887 = vmatpush1.msra.mxu0 0.0
    %1888 = vmatprep.subr.mxu0 0.0
    %1889 = vmatpush1.msra.mxu0 0.0
    %1890 = vmatprep.subr.mxu0 0.0
    %1891 = vmatpush1.msra.mxu0 0.0
    %1892 = vmatprep.mubr.f32.mxu0 0.0
    %v1893 = vand.u32 %v1572, 4294901760
    %v1894 = vsub.f32 %v1572, %v1893
    %v1895 = vand.u32 %v1894, 4294901760
    %1896 = vmatmul.mubr.f32.gmra.mrb[0].mxu0 %v1895
    %v1897 = vpop.f32.mrb[0].mxu0
    %v1898 = vadd.f32 %v1821, %v1897
    %v1899 = vpop.f32.mrb[0].mxu0
    %1900 = vdwg.mxu0
    %1901 = vmatprep.subr.mxu0 0.0
    %v1902 = vand.u32 %v1560, 4294901760
    %v1903 = vsub.f32 %v1560, %v1902
    %v1904 = vand.u32 %v1903, 4294901760
    %1905 = vmatpush1.msra.mxu0 %v1904
    %1906 = vmatprep.subr.mxu0 0.0
    %v1907 = vand.u32 %v1561, 4294901760
    %v1908 = vsub.f32 %v1561, %v1907
    %v1909 = vand.u32 %v1908, 4294901760
    %1910 = vmatpush1.msra.mxu0 %v1909
    %1911 = vmatprep.subr.mxu0 0.0
    %v1912 = vand.u32 %v1562, 4294901760
    %v1913 = vsub.f32 %v1562, %v1912
    %v1914 = vand.u32 %v1913, 4294901760
    %1915 = vmatpush1.msra.mxu0 %v1914
    %1916 = vmatprep.subr.mxu0 0.0
    %v1917 = vand.u32 %v1563, 4294901760
    %v1918 = vsub.f32 %v1563, %v1917
    %v1919 = vand.u32 %v1918, 4294901760
    %1920 = vmatpush1.msra.mxu0 %v1919
    %1921 = vmatprep.subr.mxu0 0.0
    %1922 = vmatpush1.msra.mxu0 0.0
    %1923 = vmatprep.subr.mxu0 0.0
    %1924 = vmatpush1.msra.mxu0 0.0
    %1925 = vmatprep.subr.mxu0 0.0
    %1926 = vmatpush1.msra.mxu0 0.0
    %1927 = vmatprep.subr.mxu0 0.0
    %1928 = vmatpush1.msra.mxu0 0.0
    %1929 = vmatprep.subr.mxu0 0.0
    %1930 = vmatpush1.msra.mxu0 0.0
    %1931 = vmatprep.subr.mxu0 0.0
    %1932 = vmatpush1.msra.mxu0 0.0
    %1933 = vmatprep.subr.mxu0 0.0
    %1934 = vmatpush1.msra.mxu0 0.0
    %1935 = vmatprep.subr.mxu0 0.0
    %1936 = vmatpush1.msra.mxu0 0.0
    %1937 = vmatprep.subr.mxu0 0.0
    %1938 = vmatpush1.msra.mxu0 0.0
    %1939 = vmatprep.subr.mxu0 0.0
    %1940 = vmatpush1.msra.mxu0 0.0
    %1941 = vmatprep.subr.mxu0 0.0
    %1942 = vmatpush1.msra.mxu0 0.0
    %1943 = vmatprep.subr.mxu0 0.0
    %1944 = vmatpush1.msra.mxu0 0.0
    %1945 = vmatprep.subr.mxu0 0.0
    %1946 = vmatpush1.msra.mxu0 0.0
    %1947 = vmatprep.subr.mxu0 0.0
    %1948 = vmatpush1.msra.mxu0 0.0
    %1949 = vmatprep.subr.mxu0 0.0
    %1950 = vmatpush1.msra.mxu0 0.0
    %1951 = vmatprep.subr.mxu0 0.0
    %1952 = vmatpush1.msra.mxu0 0.0
    %1953 = vmatprep.subr.mxu0 0.0
    %1954 = vmatpush1.msra.mxu0 0.0
    %1955 = vmatprep.subr.mxu0 0.0
    %1956 = vmatpush1.msra.mxu0 0.0
    %1957 = vmatprep.subr.mxu0 0.0
    %1958 = vmatpush1.msra.mxu0 0.0
    %1959 = vmatprep.subr.mxu0 0.0
    %1960 = vmatpush1.msra.mxu0 0.0
    %1961 = vmatprep.subr.mxu0 0.0
    %1962 = vmatpush1.msra.mxu0 0.0
    %1963 = vmatprep.subr.mxu0 0.0
    %1964 = vmatpush1.msra.mxu0 0.0
    %1965 = vmatprep.subr.mxu0 0.0
    %1966 = vmatpush1.msra.mxu0 0.0
    %1967 = vmatprep.subr.mxu0 0.0
    %1968 = vmatpush1.msra.mxu0 0.0
    %1969 = vmatprep.subr.mxu0 0.0
    %1970 = vmatpush1.msra.mxu0 0.0
    %1971 = vmatprep.subr.mxu0 0.0
    %1972 = vmatpush1.msra.mxu0 0.0
    %1973 = vmatprep.subr.mxu0 0.0
    %1974 = vmatpush1.msra.mxu0 0.0
    %1975 = vmatprep.subr.mxu0 0.0
    %1976 = vmatpush1.msra.mxu0 0.0
    %1977 = vmatprep.mubr.f32.mxu0 0.0
    %v1978 = vand.u32 %v1572, 4294901760
    %1979 = vmatmul.mubr.f32.gmra.mrb[0].mxu0 %v1978
    %v1980 = vpop.f32.mrb[0].mxu0
    %v1981 = vadd.f32 %v1898, %v1980
    %v1982 = vpop.f32.mrb[0].mxu0
    %1983 = vdwg.mxu0
    %1984 = vmatprep.subr.mxu0 0.0
    %v1985 = vand.u32 %v1560, 4294901760
    %1986 = vmatpush1.msra.mxu0 %v1985
    %1987 = vmatprep.subr.mxu0 0.0
    %v1988 = vand.u32 %v1561, 4294901760
    %1989 = vmatpush1.msra.mxu0 %v1988
    %1990 = vmatprep.subr.mxu0 0.0
    %v1991 = vand.u32 %v1562, 4294901760
    %1992 = vmatpush1.msra.mxu0 %v1991
    %1993 = vmatprep.subr.mxu0 0.0
    %v1994 = vand.u32 %v1563, 4294901760
    %1995 = vmatpush1.msra.mxu0 %v1994
    %1996 = vmatprep.subr.mxu0 0.0
    %1997 = vmatpush1.msra.mxu0 0.0
    %1998 = vmatprep.subr.mxu0 0.0
    %1999 = vmatpush1.msra.mxu0 0.0
    %2000 = vmatprep.subr.mxu0 0.0
    %2001 = vmatpush1.msra.mxu0 0.0
    %2002 = vmatprep.subr.mxu0 0.0
    %2003 = vmatpush1.msra.mxu0 0.0
    %2004 = vmatprep.subr.mxu0 0.0
    %2005 = vmatpush1.msra.mxu0 0.0
    %2006 = vmatprep.subr.mxu0 0.0
    %2007 = vmatpush1.msra.mxu0 0.0
    %2008 = vmatprep.subr.mxu0 0.0
    %2009 = vmatpush1.msra.mxu0 0.0
    %2010 = vmatprep.subr.mxu0 0.0
    %2011 = vmatpush1.msra.mxu0 0.0
    %2012 = vmatprep.subr.mxu0 0.0
    %2013 = vmatpush1.msra.mxu0 0.0
    %2014 = vmatprep.subr.mxu0 0.0
    %2015 = vmatpush1.msra.mxu0 0.0
    %2016 = vmatprep.subr.mxu0 0.0
    %2017 = vmatpush1.msra.mxu0 0.0
    %2018 = vmatprep.subr.mxu0 0.0
    %2019 = vmatpush1.msra.mxu0 0.0
    %2020 = vmatprep.subr.mxu0 0.0
    %2021 = vmatpush1.msra.mxu0 0.0
    %2022 = vmatprep.subr.mxu0 0.0
    %2023 = vmatpush1.msra.mxu0 0.0
    %2024 = vmatprep.subr.mxu0 0.0
    %2025 = vmatpush1.msra.mxu0 0.0
    %2026 = vmatprep.subr.mxu0 0.0
    %2027 = vmatpush1.msra.mxu0 0.0
    %2028 = vmatprep.subr.mxu0 0.0
    %2029 = vmatpush1.msra.mxu0 0.0
    %2030 = vmatprep.subr.mxu0 0.0
    %2031 = vmatpush1.msra.mxu0 0.0
    %2032 = vmatprep.subr.mxu0 0.0
    %2033 = vmatpush1.msra.mxu0 0.0
    %2034 = vmatprep.subr.mxu0 0.0
    %2035 = vmatpush1.msra.mxu0 0.0
    %2036 = vmatprep.subr.mxu0 0.0
    %2037 = vmatpush1.msra.mxu0 0.0
    %2038 = vmatprep.subr.mxu0 0.0
    %2039 = vmatpush1.msra.mxu0 0.0
    %2040 = vmatprep.subr.mxu0 0.0
    %2041 = vmatpush1.msra.mxu0 0.0
    %2042 = vmatprep.subr.mxu0 0.0
    %2043 = vmatpush1.msra.mxu0 0.0
    %2044 = vmatprep.subr.mxu0 0.0
    %2045 = vmatpush1.msra.mxu0 0.0
    %2046 = vmatprep.subr.mxu0 0.0
    %2047 = vmatpush1.msra.mxu0 0.0
    %2048 = vmatprep.subr.mxu0 0.0
    %2049 = vmatpush1.msra.mxu0 0.0
    %2050 = vmatprep.subr.mxu0 0.0
    %2051 = vmatpush1.msra.mxu0 0.0
    %2052 = vmatprep.mubr.f32.mxu0 0.0
    %v2053 = vand.u32 %v1572, 4294901760
    %2054 = vmatmul.mubr.f32.gmra.mrb[0].mxu0 %v2053
    %v2055 = vpop.f32.mrb[0].mxu0
    %v2056 = vadd.f32 %v1981, %v2055
    %v2057 = vpop.f32.mrb[0].mxu0
    %2058 = vdwg.mxu0
    %v2059 = vtanh.pop %v2056
    %2060 = vxpose.xlu0.b32.start [1/16] %v2059, 128
    %2061 = vxpose.xlu0.b32.cont [2/16] 0.0, 128
    %2062 = vxpose.xlu0.b32.cont [3/16] 0.0, 128
    %2063 = vxpose.xlu0.b32.cont [4/16] 0.0, 128
    %2064 = vxpose.xlu0.b32.cont [5/16] 0.0, 128
    %2065 = vxpose.xlu0.b32.cont [6/16] 0.0, 128
    %2066 = vxpose.xlu0.b32.cont [7/16] 0.0, 128
    %2067 = vxpose.xlu0.b32.cont [8/16] 0.0, 128
    %2068 = vxpose.xlu0.b32.cont [9/16] 0.0, 128
    %2069 = vxpose.xlu0.b32.cont [10/16] 0.0, 128
    %2070 = vxpose.xlu0.b32.cont [11/16] 0.0, 128
    %2071 = vxpose.xlu0.b32.cont [12/16] 0.0, 128
    %2072 = vxpose.xlu0.b32.cont [13/16] 0.0, 128
    %2073 = vxpose.xlu0.b32.cont [14/16] 0.0, 128
    %2074 = vxpose.xlu0.b32.cont [15/16] 0.0, 128
    %2075 = vxpose.xlu0.b32.end [16/16] 0.0, 128
    %v2076 = vpop.trf.xlu0
    %v2077 = vpop.trf.xlu0
    %v2078 = vpop.trf.xlu0
    %v2079 = vpop.trf.xlu0
    %v2080 = vpop.trf.xlu0
    %v2081 = vpop.trf.xlu0
    %v2082 = vpop.trf.xlu0
    %v2083 = vpop.trf.xlu0
    %v2084 = vpop.trf.xlu0
    %v2085 = vpop.trf.xlu0
    %v2086 = vpop.trf.xlu0
    %v2087 = vpop.trf.xlu0
    %v2088 = vpop.trf.xlu0
    %v2089 = vpop.trf.xlu0
    %v2090 = vpop.trf.xlu0
    %v2091 = vpop.trf.xlu0
    %vm2092 = vcmask 31744
    %2093 = vst.msk [vmem:[#allocation2] sm:$0xff] %vm2092, %v2076
    %2094 = vst.msk [vmem:[#allocation2 + $0x8] sm:$0xff] %vm2092, %v2077
    %2095 = vst.msk [vmem:[#allocation2 + $0x10] sm:$0xff] %vm2092, %v2078
    %2096 = vst.msk [vmem:[#allocation2 + $0x18] sm:$0xff] %vm2092, %v2079
    %2097 = vst.msk [vmem:[#allocation2 + $0x20] sm:$0xff] %vm2092, %v2080
    %2098 = vst.msk [vmem:[#allocation2 + $0x28] sm:$0xff] %vm2092, %v2081
    %2099 = vst.msk [vmem:[#allocation2 + $0x30] sm:$0xff] %vm2092, %v2082
    %2100 = vst.msk [vmem:[#allocation2 + $0x38] sm:$0xff] %vm2092, %v2083
    %2101 = vst.msk [vmem:[#allocation2 + $0x40] sm:$0xff] %vm2092, %v2084
    %2102 = vst.msk [vmem:[#allocation2 + $0x48] sm:$0xff] %vm2092, %v2085
    %2103 = vst.msk [vmem:[#allocation2 + $0x50] sm:$0xff] %vm2092, %v2086
    %2104 = vst.msk [vmem:[#allocation2 + $0x58] sm:$0xff] %vm2092, %v2087
    %2105 = vst.msk [vmem:[#allocation2 + $0x60] sm:$0xff] %vm2092, %v2088
    %2106 = vst.msk [vmem:[#allocation2 + $0x68] sm:$0xff] %vm2092, %v2089
    %2107 = vst.msk [vmem:[#allocation2 + $0x70] sm:$0xff] %vm2092, %v2090
    %2108 = vst.msk [vmem:[#allocation2 + $0x78] sm:$0xff] %vm2092, %v2091
    // Predicated region
    $region30: #{actor_forward.1} parent=1 // pred_check
      _
    $region31: #{actor_forward.1} parent=1 // pred_check_branch
      %2110 = sbr.rel (0) target = $region33
    $region32: #{actor_forward.1} parent=1 // pred_region
      // Predicated region
      $region34: #{actor_forward.1} parent=32 // pred_check
        _
      $region35: #{actor_forward.1} parent=32 // pred_check_branch
        %2112 = sbr.rel (0) target = $region37
      $region36: #{actor_forward.1} parent=32 // pred_region
        // Predicated region
        $region38: #{actor_forward.1} parent=36 // pred_check
          _
        $region39: #{actor_forward.1} parent=36 // pred_check_branch
          %2114 = sbr.rel (0) target = $region41
        $region40: #{actor_forward.1} parent=36 // pred_region
          // Predicated region
          $region53: #{actor_forward.1} parent=40 // pred_check
            _
          $region54: #{actor_forward.1} parent=40 // pred_check_branch
            %2129 = sbr.rel (0) target = $region56
          $region55: #{actor_forward.1} parent=40 // pred_region
            loop: start=0, step=1, limit=1
            $region57: #{actor_forward.1} parent=55 // loop_pre_header
              _
            $region58: #{actor_forward.1} parent=55 // loop_header
              %s2131 = sphi 0, %s2135
              %p2132 = scmp.ge.s32.totalorder %s2131, 1
              %s2136 = sphi [#allocation2], [#allocation2]
              %s2137 = sphi %s7, %s7
            $region59: #{actor_forward.1} parent=55 // loop_header_branch
              %2134 = sbr.rel (%p2132) target = $region63
            $region60: #{actor_forward.1} parent=55 // loop_body
              %v2138 = vld [vmem:[%s2136] sm:$0xff]
              %2139 = vst [vmem:[%s2137] sm:$0xff] %v2138
            $region61: #{actor_forward.1} parent=55 // loop_footer
              %s2135 = sadd.s32 1, %s2131
            $region62: #{actor_forward.1} parent=55 // loop_footer_branch
              %2130 = sbr.rel target = $region58
            $region63: #{actor_forward.1} parent=55 // loop_exit
              _
          $region56: #{actor_forward.1} parent=40 // pred_fallthru
            _
          // Predicated region
          $region64: #{actor_forward.1} parent=40 // pred_check
            _
          $region65: #{actor_forward.1} parent=40 // pred_check_branch
            %2141 = sbr.rel target = $region67
          $region66: #{actor_forward.1} parent=40 // pred_region
            _
          $region67: #{actor_forward.1} parent=40 // pred_fallthru
            _
        $region41: #{actor_forward.1} parent=36 // pred_fallthru
          _
        // Predicated region
        $region42: #{actor_forward.1} parent=36 // pred_check
          _
        $region43: #{actor_forward.1} parent=36 // pred_check_branch
          %2116 = sbr.rel target = $region45
        $region44: #{actor_forward.1} parent=36 // pred_region
          loop: start=0, step=1, limit=1
          $region46: #{actor_forward.1} parent=44 // loop_pre_header
            _
          $region47: #{actor_forward.1} parent=44 // loop_header
            %s2119 = sphi 0, %s2123
            %p2120 = scmp.ge.s32.totalorder %s2119, 1
            %s2124 = sphi [#allocation2], [#allocation2]
            %s2125 = sphi %s7, %s7
          $region48: #{actor_forward.1} parent=44 // loop_header_branch
            %2122 = sbr.rel (%p2120) target = $region52
          $region49: #{actor_forward.1} parent=44 // loop_body
            %v2126 = vld [vmem:[%s2124] sm:$0xff]
            %2127 = vst [vmem:[%s2125] sm:$0xff] %v2126
          $region50: #{actor_forward.1} parent=44 // loop_footer
            %s2123 = sadd.s32 1, %s2119
          $region51: #{actor_forward.1} parent=44 // loop_footer_branch
            %2118 = sbr.rel target = $region47
          $region52: #{actor_forward.1} parent=44 // loop_exit
            _
        $region45: #{actor_forward.1} parent=36 // pred_fallthru
          _
      $region37: #{actor_forward.1} parent=32 // pred_fallthru
        _
      %2142 = vnop
    $region33: #{actor_forward.1} parent=1 // pred_fallthru
      _
    // Predicated region
    $region68: #{actor_forward.1} parent=1 // pred_check
      _
    $region69: #{actor_forward.1} parent=1 // pred_check_branch
      %2144 = sbr.rel (0) target = $region71
    $region70: #{actor_forward.1} parent=1 // pred_region
      _
    $region71: #{actor_forward.1} parent=1 // pred_fallthru
      _

</llo_original>
